<compile_context>
chip_gen: v7x
topology: tpu7x:2x2x1
jax: 0.10.0
libtpu: 0.0.40
codegen_flags: <defaults>
</compile_context>

<pallas_src>
import jax
import jax.numpy as jnp
from jax.experimental import pallas as pl
from jax.experimental.pallas import tpu as pltpu

HIDDEN = 128        # neural_model.config.d_model (TPU-lane friendly)
CLS_HIDDEN = 256    # query_classifier hidden width
N_ENGINES = 1       # {'mathematical'}
N_CLASSES = N_ENGINES + 1
LANE = 128          # lane-dense padding for the tiny (., 2) classifier head
SEQ = 8
VOCAB = 1024        # lane-aligned table size (ids drawn from [0, 1000) as in the module)

_VMEM = pl.BlockSpec(memory_space=pltpu.MemorySpace.VMEM)


# ------------------------------ fused kernel --------------------------------
def _fused_kernel(ids_ref, mask_ref, embed_ref,
                  w1_ref, b1_ref, w2_ref, b2_ref,
                  wi1_ref, bi1_ref, wi2_ref, bi2_ref,
                  hs_out, pooled_out, logits_out, integ_out, argmax_out):
    B, S, H = hs_out.shape
    BS = B * S

    # ---- 1. embedding gather: whole table is VMEM-resident; gather rows with a ----
    # ----    one-hot MXU matmul (exact: one nonzero per row, f32 accumulate).    ----
    ids = ids_ref[...]                                               # (BS, 1) int32
    vocab_iota = jax.lax.broadcasted_iota(jnp.int32, (BS, VOCAB), 1)
    onehot = jnp.where(vocab_iota == ids, 1.0, 0.0).astype(jnp.bfloat16)   # (BS, VOCAB)
    hs_flat = jnp.dot(onehot, embed_ref[...],
                      preferred_element_type=jnp.float32)            # (BS, H) f32
    hs = hs_flat.reshape(B, S, H)
    hs_out[...] = hs                                                 # 'outputs' of neural model

    # ---- 2. masked mean pooling (== _masked_mean_pooling) ----
    mask = mask_ref[...]                                             # (B, S) f32
    masked_sum = jnp.sum(hs * mask[:, :, None], axis=1)              # (B, H)
    denom = jnp.maximum(jnp.sum(mask, axis=1, keepdims=True), 1e-9)  # (B, 1)
    pooled = masked_sum / denom
    pooled_out[...] = pooled
    pooled_bf = pooled.astype(jnp.bfloat16)

    # ---- 3. query_classifier: Linear(H,256)->ReLU->(Dropout=id)->Linear(256, lane-padded 128) ----
    h = jnp.dot(pooled_bf, w1_ref[...], preferred_element_type=jnp.float32) + b1_ref[...]
    h = jnp.maximum(h, 0.0)
    logits = (jnp.dot(h.astype(jnp.bfloat16), w2_ref[...],
                      preferred_element_type=jnp.float32) + b2_ref[...])     # (B, LANE)
    logits_out[...] = logits

    # ---- 3b. in-kernel argmax over the first N_CLASSES lanes of batch row 0 ----
    #           (padded lanes masked so zero-padding can never win the argmax)
    lane = jax.lax.broadcasted_iota(jnp.int32, (B, LANE), 1)
    masked = jnp.where(lane < N_CLASSES, logits, -1e30)
    row0 = masked[0:1, :]                                            # (1, LANE)
    lane0 = lane[0:1, :].astype(jnp.float32)
    mx = jnp.max(row0, axis=-1, keepdims=True)                       # (1, 1)
    idx = jnp.min(jnp.where(row0 >= mx, lane0, float(LANE)),
                  axis=-1, keepdims=True)                            # first max, like argmax
    argmax_out[...] = idx.astype(jnp.int32)

    # ---- 4+5. result_integrator on concat([pooled, sym]): sym has only 3 nonzero,
    # ----      batch-constant lanes, so its matmul was folded into bi1 on the host.
    h2 = jnp.dot(pooled_bf, wi1_ref[...], preferred_element_type=jnp.float32) + bi1_ref[...]
    h2 = jnp.maximum(h2, 0.0)
    integ_out[...] = (jnp.dot(h2.astype(jnp.bfloat16), wi2_ref[...],
                              preferred_element_type=jnp.float32) + bi2_ref[...])


@jax.jit
def fused_forward(params, input_ids, attention_mask_f32, sym_scalars):
    B, S = input_ids.shape
    H = HIDDEN
    # Fold the symbolic-encoding contribution (3 nonzero lanes, batch-constant) into the
    # integrator first-layer bias: b1_eff = b1 + sym @ W1[H:H+3, :].
    bi1_eff = params["int_b1"] + sym_scalars[None, :] @ params["int_w1b3"]     # (1, H) f32
    ids_flat = input_ids.reshape(B * S, 1).astype(jnp.int32)

    return pl.pallas_call(
        _fused_kernel,
        out_shape=(
            jax.ShapeDtypeStruct((B, S, H), jnp.float32),   # hidden_states ('outputs')
            jax.ShapeDtypeStruct((B, H), jnp.float32),      # pooled
            jax.ShapeDtypeStruct((B, LANE), jnp.float32),   # lane-padded query logits
            jax.ShapeDtypeStruct((B, H), jnp.float32),      # integrated representation
            jax.ShapeDtypeStruct((1, 1), jnp.int32),        # argmax(query_logits[0,:N_CLASSES])
        ),
        in_specs=[_VMEM] * 11,
        out_specs=(_VMEM, _VMEM, _VMEM, _VMEM, _VMEM),
    )(ids_flat, attention_mask_f32, params["embed"],
      params["cls_w1"], params["cls_b1"], params["cls_w2p"], params["cls_b2p"],
      params["int_w1a"], bi1_eff, params["int_w2"], params["int_b2"])


# --------------------------- module wrapper ----------------------------------
def neuro_symbolic_forward(params, input_ids, attention_mask=None, query_text=None):
    if attention_mask is None:
        attention_mask = jnp.ones_like(input_ids)

    # TODO(synk): MathematicalReasoner (regex parsing + sympy solve/simplify/diff/
    # integrate/limit) has no Pallas equivalent; its scalar outputs are simulated here
    # (confidence, result/100, len/10) and folded into the integrator bias.
    if query_text is not None:
        confidence, numeric_result, result_list_len = 1.0, 0.0, 1
        sym_scalars = jnp.array(
            [confidence, numeric_result / 100.0, result_list_len / 10.0], jnp.float32)
        symbolic_result = "[simulated sympy solution]"
    else:
        sym_scalars = jnp.zeros((3,), jnp.float32)
        symbolic_result = None

    hs, pooled, logits_pad, integrated, qidx = fused_forward(
        params, input_ids, attention_mask.astype(jnp.float32), sym_scalars)
    query_logits = logits_pad[:, :N_CLASSES]

    # Single 4-byte host read (mirrors torch's `.item()` branch); the integrator was
    # computed speculatively in the same kernel so no second launch is needed.
    query_type_idx = int(jax.device_get(qidx)[0, 0])
    if query_type_idx == N_ENGINES or query_text is None:
        return {"outputs": hs, "reasoning_type": "neural", "symbolic_result": None,
                "pooled": pooled, "query_logits": query_logits}
    return {"outputs": hs, "reasoning_type": "neuro-symbolic",
            "symbolic_result": symbolic_result,
            "integrated_representation": integrated,
            "pooled": pooled, "query_logits": query_logits}


# --------------------------- reference (pure JAX) -----------------------------
def _reference(ids, mask, sym_scalars, params):
    hs = jnp.take(params["embed"], ids, axis=0).astype(jnp.float32)
    me = mask[:, :, None]
    pooled = (hs * me).sum(1) / jnp.maximum(me.sum(1), 1e-9)
    pooled_bf = pooled.astype(jnp.bfloat16)

    h = jnp.maximum(jnp.dot(pooled_bf, params["cls_w1"],
                            preferred_element_type=jnp.float32) + params["cls_b1"], 0.0)
    logits = jnp.dot(h.astype(jnp.bfloat16), params["cls_w2p"],
                     preferred_element_type=jnp.float32) + params["cls_b2p"]

    bi1_eff = params["int_b1"] + sym_scalars[None, :] @ params["int_w1b3"]
    h2 = jnp.maximum(
        jnp.dot(pooled_bf, params["int_w1a"], preferred_element_type=jnp.float32) + bi1_eff, 0.0)
    integ = jnp.dot(h2.astype(jnp.bfloat16), params["int_w2"],
                    preferred_element_type=jnp.float32) + params["int_b2"]
    return hs, pooled, logits, integ


def init_params(key):
    ks = jax.random.split(key, 6)
    s = 0.02
    cls_w2 = jax.random.normal(ks[2], (CLS_HIDDEN, N_CLASSES), jnp.float32) * s
    cls_w2p = jnp.zeros((CLS_HIDDEN, LANE), jnp.float32).at[:, :N_CLASSES].set(cls_w2)
    return {
        # bf16 table: halves gather bytes; gather stays exact (one-hot, f32 accumulate).
        "embed":   (jax.random.normal(ks[0], (VOCAB, HIDDEN), jnp.float32) * s).astype(jnp.bfloat16),
        "cls_w1":  (jax.random.normal(ks[1], (HIDDEN, CLS_HIDDEN), jnp.float32) * s).astype(jnp.bfloat16),
        "cls_b1":  jnp.zeros((1, CLS_HIDDEN), jnp.float32),
        "cls_w2p": cls_w2p.astype(jnp.bfloat16),                     # lane-padded to 128
        "cls_b2p": jnp.zeros((1, LANE), jnp.float32),
        "int_w1a": (jax.random.normal(ks[3], (HIDDEN, HIDDEN), jnp.float32) * s).astype(jnp.bfloat16),
        # Only rows H..H+2 of the integrator's W1 "sym half" are ever touched
        # (_encode_symbolic_result writes 3 scalars); kept f32 and folded into the bias.
        "int_w1b3": jax.random.normal(ks[4], (3, HIDDEN), jnp.float32) * s,
        "int_b1":  jnp.zeros((1, HIDDEN), jnp.float32),
        "int_w2":  (jax.random.normal(ks[5], (HIDDEN, HIDDEN), jnp.float32) * s).astype(jnp.bfloat16),
        "int_b2":  jnp.zeros((1, HIDDEN), jnp.float32),
    }


if __name__ == "__main__":
    key = jax.random.PRNGKey(0)
    pkey, ikey = jax.random.split(key)
    params = init_params(pkey)

    # Module-semantics path (B=1, host branch on the in-kernel argmax, like torch .item()).
    input_ids = jax.random.randint(ikey, (1, SEQ), 0, 1000)
    attention_mask = jnp.ones((1, SEQ), jnp.int32)
    out = neuro_symbolic_forward(params, input_ids, attention_mask,
                                 query_text="solve x + 2 = 5")
    jax.block_until_ready(out["pooled"])
    assert out["reasoning_type"] in ("neural", "neuro-symbolic")

    # Verify the fused kernel against the pure-JAX reference at B=1 and batched B=8,
    # with a partially-zero attention mask to exercise masked mean pooling.
    sym_scalars = jnp.array([1.0, 0.0, 0.1], jnp.float32)
    for B in (1, 8):
        ids = jax.random.randint(jax.random.fold_in(ikey, B), (B, SEQ), 0, 1000)
        maskf = jnp.broadcast_to(
            (jnp.arange(SEQ)[None, :] < 6).astype(jnp.float32), (B, SEQ))
        hs_k, pooled_k, logits_k, integ_k, qidx_k = fused_forward(params, ids, maskf, sym_scalars)
        jax.block_until_ready((hs_k, pooled_k, logits_k, integ_k, qidx_k))
        hs_r, pooled_r, logits_r, integ_r = _reference(ids, maskf, sym_scalars, params)
        assert jnp.allclose(hs_k, hs_r, atol=1e-6), f"embedding gather mismatch (B={B})"
        assert jnp.allclose(pooled_k, pooled_r, atol=1e-5), f"pooling mismatch (B={B})"
        assert jnp.allclose(logits_k, logits_r, atol=2e-4), f"classifier mismatch (B={B})"
        assert jnp.allclose(integ_k, integ_r, atol=2e-4), f"integrator mismatch (B={B})"
        assert int(qidx_k[0, 0]) == int(jnp.argmax(logits_k[0, :N_CLASSES])), \
            f"in-kernel argmax mismatch (B={B})"

    print("KERNEL_OK")
</pallas_src>

<mosaic_0001>
module attributes {stable_mosaic.version = 11 : i64} {
  func.func @_fused_kernel(%arg0: memref<8x1xi32, #tpu.memory_space<vmem>>, %arg1: memref<1x8xf32, #tpu.memory_space<vmem>>, %arg2: memref<1024x128xbf16, #tpu.memory_space<vmem>>, %arg3: memref<128x256xbf16, #tpu.memory_space<vmem>>, %arg4: memref<1x256xf32, #tpu.memory_space<vmem>>, %arg5: memref<256x128xbf16, #tpu.memory_space<vmem>>, %arg6: memref<1x128xf32, #tpu.memory_space<vmem>>, %arg7: memref<128x128xbf16, #tpu.memory_space<vmem>>, %arg8: memref<1x128xf32, #tpu.memory_space<vmem>>, %arg9: memref<128x128xbf16, #tpu.memory_space<vmem>>, %arg10: memref<1x128xf32, #tpu.memory_space<vmem>>, %arg11: memref<1x8x128xf32, #tpu.memory_space<vmem>>, %arg12: memref<1x128xf32, #tpu.memory_space<vmem>>, %arg13: memref<1x128xf32, #tpu.memory_space<vmem>>, %arg14: memref<1x128xf32, #tpu.memory_space<vmem>>, %arg15: memref<1x1xi32, #tpu.memory_space<vmem>>) attributes {dimension_semantics = [], scalar_prefetch = 0 : i64, scratch_operands = 0 : i64, tpu.core_type = #tpu.core_type<tc>} {
    %c0 = arith.constant 0 : index
    %c0_0 = arith.constant 0 : index
    %0 = vector.load %arg0[%c0, %c0_0] : memref<8x1xi32, #tpu.memory_space<vmem>>, vector<8x1xi32>
    %1 = tpu.iota {dimensions = array<i32: 1>} : vector<8x1024xi32>
    %2 = vector.broadcast %0 : vector<8x1xi32> to vector<8x1024xi32>
    %3 = arith.cmpi eq, %1, %2 : vector<8x1024xi32>
    %cst = arith.constant 1.000000e+00 : f32
    %cst_1 = arith.constant 0.000000e+00 : f32
    %4 = vector.broadcast %cst : f32 to vector<8x1024xf32>
    %5 = vector.broadcast %cst_1 : f32 to vector<8x1024xf32>
    %6 = arith.select %3, %4, %5 : vector<8x1024xi1>, vector<8x1024xf32>
    %7 = arith.truncf %6 : vector<8x1024xf32> to vector<8x1024xbf16>
    %c0_2 = arith.constant 0 : index
    %c0_3 = arith.constant 0 : index
    %8 = vector.load %arg2[%c0_2, %c0_3] : memref<1024x128xbf16, #tpu.memory_space<vmem>>, vector<1024x128xbf16>
    %cst_4 = arith.constant dense<0.000000e+00> : vector<8x128xf32>
    %9 = tpu.matmul %7, %8, %cst_4 {dimension_numbers = #tpu.dot_dimension_numbers<[1], [0], [0], [1], [0, 0, 1, 1], [], []>} : vector<8x1024xbf16>, vector<1024x128xbf16>, vector<8x128xf32> -> vector<8x128xf32>
    %10 = vector.shape_cast %9 : vector<8x128xf32> to vector<1x8x128xf32>
    %c0_5 = arith.constant 0 : index
    %c0_6 = arith.constant 0 : index
    %c0_7 = arith.constant 0 : index
    %11 = vector.load %arg11[%c0_5, %c0_6, %c0_7] : memref<1x8x128xf32, #tpu.memory_space<vmem>>, vector<1x8x128xf32>
    tpu.vector_store %arg11[%c0_5, %c0_6, %c0_7], %10 {strides = array<i32>} : memref<1x8x128xf32, #tpu.memory_space<vmem>>, vector<1x8x128xf32>,
    %c0_8 = arith.constant 0 : index
    %c0_9 = arith.constant 0 : index
    %12 = vector.load %arg1[%c0_8, %c0_9] : memref<1x8xf32, #tpu.memory_space<vmem>>, vector<1x8xf32>
    %13 = vector.shape_cast %12 : vector<1x8xf32> to vector<1x8x1xf32>
    %14 = vector.broadcast %13 : vector<1x8x1xf32> to vector<1x8x128xf32>
    %15 = arith.mulf %10, %14 : vector<1x8x128xf32>
    %cst_10 = arith.constant dense<0.000000e+00> : vector<1x128xf32>
    %16 = vector.multi_reduction <add>, %15, %cst_10 [1] : vector<1x8x128xf32> to vector<1x128xf32>
    %cst_11 = arith.constant dense<0.000000e+00> : vector<1xf32>
    %17 = vector.multi_reduction <add>, %12, %cst_11 [1] : vector<1x8xf32> to vector<1xf32>
    %18 = vector.shape_cast %17 : vector<1xf32> to vector<1x1xf32>
    %cst_12 = arith.constant 9.99999971E-10 : f32
    %19 = vector.broadcast %cst_12 : f32 to vector<1x1xf32>
    %20 = arith.maximumf %18, %19 : vector<1x1xf32>
    %21 = vector.broadcast %20 : vector<1x1xf32> to vector<1x128xf32>
    %22 = arith.divf %16, %21 : vector<1x128xf32>
    %c0_13 = arith.constant 0 : index
    %c0_14 = arith.constant 0 : index
    %23 = vector.load %arg12[%c0_13, %c0_14] : memref<1x128xf32, #tpu.memory_space<vmem>>, vector<1x128xf32>
    tpu.vector_store %arg12[%c0_13, %c0_14], %22 {strides = array<i32>} : memref<1x128xf32, #tpu.memory_space<vmem>>, vector<1x128xf32>,
    %24 = arith.truncf %22 : vector<1x128xf32> to vector<1x128xbf16>
    %c0_15 = arith.constant 0 : index
    %c0_16 = arith.constant 0 : index
    %25 = vector.load %arg3[%c0_15, %c0_16] : memref<128x256xbf16, #tpu.memory_space<vmem>>, vector<128x256xbf16>
    %cst_17 = arith.constant dense<0.000000e+00> : vector<1x256xf32>
    %26 = tpu.matmul %24, %25, %cst_17 {dimension_numbers = #tpu.dot_dimension_numbers<[1], [0], [0], [1], [0, 0, 1, 1], [], []>} : vector<1x128xbf16>, vector<128x256xbf16>, vector<1x256xf32> -> vector<1x256xf32>
    %c0_18 = arith.constant 0 : index
    %c0_19 = arith.constant 0 : index
    %27 = vector.load %arg4[%c0_18, %c0_19] : memref<1x256xf32, #tpu.memory_space<vmem>>, vector<1x256xf32>
    %28 = arith.addf %26, %27 : vector<1x256xf32>
    %cst_20 = arith.constant 0.000000e+00 : f32
    %29 = vector.broadcast %cst_20 : f32 to vector<1x256xf32>
    %30 = arith.maximumf %28, %29 : vector<1x256xf32>
    %31 = arith.truncf %30 : vector<1x256xf32> to vector<1x256xbf16>
    %c0_21 = arith.constant 0 : index
    %c0_22 = arith.constant 0 : index
    %32 = vector.load %arg5[%c0_21, %c0_22] : memref<256x128xbf16, #tpu.memory_space<vmem>>, vector<256x128xbf16>
    %cst_23 = arith.constant dense<0.000000e+00> : vector<1x128xf32>
    %33 = tpu.matmul %31, %32, %cst_23 {dimension_numbers = #tpu.dot_dimension_numbers<[1], [0], [0], [1], [0, 0, 1, 1], [], []>} : vector<1x256xbf16>, vector<256x128xbf16>, vector<1x128xf32> -> vector<1x128xf32>
    %c0_24 = arith.constant 0 : index
    %c0_25 = arith.constant 0 : index
    %34 = vector.load %arg6[%c0_24, %c0_25] : memref<1x128xf32, #tpu.memory_space<vmem>>, vector<1x128xf32>
    %35 = arith.addf %33, %34 : vector<1x128xf32>
    %c0_26 = arith.constant 0 : index
    %c0_27 = arith.constant 0 : index
    %36 = vector.load %arg13[%c0_26, %c0_27] : memref<1x128xf32, #tpu.memory_space<vmem>>, vector<1x128xf32>
    tpu.vector_store %arg13[%c0_26, %c0_27], %35 {strides = array<i32>} : memref<1x128xf32, #tpu.memory_space<vmem>>, vector<1x128xf32>,
    %37 = tpu.iota {dimensions = array<i32: 1>} : vector<1x128xi32>
    %c2_i32 = arith.constant 2 : i32
    %38 = vector.broadcast %c2_i32 : i32 to vector<1x128xi32>
    %39 = arith.cmpi slt, %37, %38 : vector<1x128xi32>
    %cst_28 = arith.constant -1.000000e+30 : f32
    %40 = vector.broadcast %cst_28 : f32 to vector<1x128xf32>
    %41 = arith.select %39, %35, %40 : vector<1x128xi1>, vector<1x128xf32>
    %42 = arith.sitofp %37 : vector<1x128xi32> to vector<1x128xf32>
    %cst_29 = arith.constant dense<0xFF800000> : vector<1xf32>
    %43 = vector.multi_reduction <maximumf>, %41, %cst_29 [1] : vector<1x128xf32> to vector<1xf32>
    %44 = vector.shape_cast %43 : vector<1xf32> to vector<1x1xf32>
    %45 = vector.broadcast %44 : vector<1x1xf32> to vector<1x128xf32>
    %46 = arith.cmpf oge, %41, %45 : vector<1x128xf32>
    %cst_30 = arith.constant 1.280000e+02 : f32
    %47 = vector.broadcast %cst_30 : f32 to vector<1x128xf32>
    %48 = arith.select %46, %42, %47 : vector<1x128xi1>, vector<1x128xf32>
    %cst_31 = arith.constant dense<0x7F800000> : vector<1xf32>
    %49 = vector.multi_reduction <minimumf>, %48, %cst_31 [1] : vector<1x128xf32> to vector<1xf32>
    %50 = vector.shape_cast %49 : vector<1xf32> to vector<1x1xf32>
    %51 = arith.fptosi %50 : vector<1x1xf32> to vector<1x1xi32>
    %c0_32 = arith.constant 0 : index
    %c0_33 = arith.constant 0 : index
    %52 = vector.load %arg15[%c0_32, %c0_33] : memref<1x1xi32, #tpu.memory_space<vmem>>, vector<1x1xi32>
    tpu.vector_store %arg15[%c0_32, %c0_33], %51 {strides = array<i32>} : memref<1x1xi32, #tpu.memory_space<vmem>>, vector<1x1xi32>,
    %c0_34 = arith.constant 0 : index
    %c0_35 = arith.constant 0 : index
    %53 = vector.load %arg7[%c0_34, %c0_35] : memref<128x128xbf16, #tpu.memory_space<vmem>>, vector<128x128xbf16>
    %cst_36 = arith.constant dense<0.000000e+00> : vector<1x128xf32>
    %54 = tpu.matmul %24, %53, %cst_36 {dimension_numbers = #tpu.dot_dimension_numbers<[1], [0], [0], [1], [0, 0, 1, 1], [], []>} : vector<1x128xbf16>, vector<128x128xbf16>, vector<1x128xf32> -> vector<1x128xf32>
    %c0_37 = arith.constant 0 : index
    %c0_38 = arith.constant 0 : index
    %55 = vector.load %arg8[%c0_37, %c0_38] : memref<1x128xf32, #tpu.memory_space<vmem>>, vector<1x128xf32>
    %56 = arith.addf %54, %55 : vector<1x128xf32>
    %cst_39 = arith.constant 0.000000e+00 : f32
    %57 = vector.broadcast %cst_39 : f32 to vector<1x128xf32>
    %58 = arith.maximumf %56, %57 : vector<1x128xf32>
    %59 = arith.truncf %58 : vector<1x128xf32> to vector<1x128xbf16>
    %c0_40 = arith.constant 0 : index
    %c0_41 = arith.constant 0 : index
    %60 = vector.load %arg9[%c0_40, %c0_41] : memref<128x128xbf16, #tpu.memory_space<vmem>>, vector<128x128xbf16>
    %cst_42 = arith.constant dense<0.000000e+00> : vector<1x128xf32>
    %61 = tpu.matmul %59, %60, %cst_42 {dimension_numbers = #tpu.dot_dimension_numbers<[1], [0], [0], [1], [0, 0, 1, 1], [], []>} : vector<1x128xbf16>, vector<128x128xbf16>, vector<1x128xf32> -> vector<1x128xf32>
    %c0_43 = arith.constant 0 : index
    %c0_44 = arith.constant 0 : index
    %62 = vector.load %arg10[%c0_43, %c0_44] : memref<1x128xf32, #tpu.memory_space<vmem>>, vector<1x128xf32>
    %63 = arith.addf %61, %62 : vector<1x128xf32>
    %c0_45 = arith.constant 0 : index
    %c0_46 = arith.constant 0 : index
    %64 = vector.load %arg14[%c0_45, %c0_46] : memref<1x128xf32, #tpu.memory_space<vmem>>, vector<1x128xf32>
    tpu.vector_store %arg14[%c0_45, %c0_46], %63 {strides = array<i32>} : memref<1x128xf32, #tpu.memory_space<vmem>>, vector<1x128xf32>,
    return
  }
}

</mosaic_0001>

<llo_original>
// kernel: fused_forward.1
$region0: #{fused_forward.1}
  #allocation0 [shape = 'u32[]', space=smem, size = 0x4, offset = 0x4, fixed_abs, tag = 'smem constant byte address 0x4 - core index']
  #allocation1 [shape = 'u32[144,128]{1,0:T(1,128)}', space=vmem, size = 0x12000, scoped, tag = 'internal scratch']
  %s0 = inlined_call_operand.vmem [shape: s32[8,1], index: 0, kind: input, shape index: {}]
  %s1 = inlined_call_operand.vmem [shape: f32[1,8], index: 1, kind: input, shape index: {}]
  %s2 = inlined_call_operand.hbm [shape: bf16[1024,128], index: 2, kind: input, shape index: {}]
  %s3 = inlined_call_operand.hbm [shape: bf16[128,256], index: 3, kind: input, shape index: {}]
  %s4 = inlined_call_operand.vmem [shape: f32[1,256], index: 4, kind: input, shape index: {}]
  %s5 = inlined_call_operand.hbm [shape: bf16[256,128], index: 5, kind: input, shape index: {}]
  %s6 = inlined_call_operand.vmem [shape: f32[1,128], index: 6, kind: input, shape index: {}]
  %s7 = inlined_call_operand.hbm [shape: bf16[128,128], index: 7, kind: input, shape index: {}]
  %s8 = inlined_call_operand.vmem [shape: f32[1,128], index: 8, kind: input, shape index: {}]
  %s9 = inlined_call_operand.hbm [shape: bf16[128,128], index: 9, kind: input, shape index: {}]
  %s10 = inlined_call_operand.vmem [shape: f32[1,128], index: 10, kind: input, shape index: {}]
  %s11 = inlined_call_operand.hbm [shape: f32[1,8,128], index: 11, kind: output, shape index: {0}]
  %s12 = inlined_call_operand.hbm [shape: f32[1,128], index: 12, kind: output, shape index: {1}]
  %s13 = inlined_call_operand.hbm [shape: f32[1,128], index: 13, kind: output, shape index: {2}]
  %s14 = inlined_call_operand.hbm [shape: f32[1,128], index: 14, kind: output, shape index: {3}]
  %s15 = inlined_call_operand.hbm [shape: s32[1,1], index: 15, kind: output, shape index: {4}]
  %16 = xla_tuple %s11, %s12, %s13, %s14, %s15
  %s17 = sld [smem:[#allocation0]]
  $region106: #{fused_forward.1} parent=0
    _
  %s19 = ssub.s32 1, %s17
  %s20 = scalar_select 0, %s19, %s17
  $region1: #{fused_forward.1} parent=0
    #allocation2 [shape = 'u8[262144]{0}', space=vmem, size = 0x40000, scoped, tag = 'input window, operand 2, single buffered']
    #allocation3 [shape = 's32[1]{0}', space=sflag, size = 0x4, scoped, tag = 'scoped memory for fused_forward.1']
    #allocation4 [shape = 's32[1]{0}', space=sflag, size = 0x4, scoped, tag = 'scoped memory for fused_forward.1']
    #allocation5 [shape = 'u8[65536]{0}', space=vmem, size = 0x10000, scoped, tag = 'input window, operand 3, single buffered']
    #allocation6 [shape = 's32[1]{0}', space=sflag, size = 0x4, scoped, tag = 'scoped memory for fused_forward.1']
    #allocation7 [shape = 'u8[65536]{0}', space=vmem, size = 0x10000, scoped, tag = 'input window, operand 5, single buffered']
    #allocation8 [shape = 'u8[32768]{0}', space=vmem, size = 0x8000, scoped, tag = 'input window, operand 7, single buffered']
    #allocation9 [shape = 's32[1]{0}', space=sflag, size = 0x4, scoped, tag = 'scoped memory for fused_forward.1']
    #allocation10 [shape = 'u8[32768]{0}', space=vmem, size = 0x8000, scoped, tag = 'input window, operand 9, single buffered']
    #allocation11 [shape = 'u8[4096]{0}', space=vmem, size = 0x1000, scoped, tag = 'output window, operand 0, single buffered']
    #allocation12 [shape = 'u8[512]{0}', space=vmem, size = 0x400, scoped, tag = 'output window, operand 1, single buffered']
    #allocation13 [shape = 's32[1]{0}', space=sflag, size = 0x4, scoped, tag = 'scoped memory for fused_forward.1']
    #allocation14 [shape = 'u8[512]{0}', space=vmem, size = 0x400, scoped, tag = 'output window, operand 2, single buffered']
    #allocation15 [shape = 'u8[512]{0}', space=vmem, size = 0x400, scoped, tag = 'output window, operand 3, single buffered']
    #allocation16 [shape = 's32[1]{0}', space=sflag, size = 0x4, scoped, tag = 'scoped memory for fused_forward.1']
    #allocation17 [shape = 'u8[512]{0}', space=vmem, size = 0x400, scoped, tag = 'output window, operand 4, single buffered']
    %21 = vsyncpa [#allocation3], 0
    %22 = vsyncpa [#allocation6], 0
    %23 = vsyncpa [#allocation9], 0
    %24 = vsyncpa [#allocation4], 0
    %25 = vsyncpa [#allocation13], 0
    %26 = vsyncpa [#allocation16], 0
    // Predicated region
    $region2: #{fused_forward.1} parent=1 // pred_check
      _
    $region3: #{fused_forward.1} parent=1 // pred_check_branch
      %28 = sbr.rel (0) target = $region5
    $region4: #{fused_forward.1} parent=1 // pred_region
      _
    $region5: #{fused_forward.1} parent=1 // pred_fallthru
      _
    // Predicated region
    $region6: #{fused_forward.1} parent=1 // pred_check
      _
    $region7: #{fused_forward.1} parent=1 // pred_check_branch
      %30 = sbr.rel (0) target = $region9
    $region8: #{fused_forward.1} parent=1 // pred_region
      _
    $region9: #{fused_forward.1} parent=1 // pred_fallthru
      _
    // Predicated region
    $region10: #{fused_forward.1} parent=1 // pred_check
      _
    $region11: #{fused_forward.1} parent=1 // pred_check_branch
      %32 = sbr.rel (0) target = $region13
    $region12: #{fused_forward.1} parent=1 // pred_region
      %s34 = ssub.s32 8192, 8192
      %35 = vsyncadd [#allocation3], %s34
      %s36 = sshll.u32 [#allocation2], 4
      %s37 = int_to_ptr.vmem [resolvable:$true] %s36
      %42 = dma.hbm_to_vmem [thread:$0]  %s2, 8192, %s37, [#allocation3], 64, 64, 4
    $region13: #{fused_forward.1} parent=1 // pred_fallthru
      _
    // Predicated region
    $region14: #{fused_forward.1} parent=1 // pred_check
      _
    $region15: #{fused_forward.1} parent=1 // pred_check_branch
      %44 = sbr.rel (0) target = $region17
    $region16: #{fused_forward.1} parent=1 // pred_region
      %s46 = ssub.s32 2048, 2048
      %47 = vsyncadd [#allocation6], %s46
      %s48 = sshll.u32 [#allocation5], 4
      %s49 = int_to_ptr.vmem [resolvable:$true] %s48
      %54 = dma.hbm_to_vmem [thread:$0]  %s3, 2048, %s49, [#allocation6], 128, 128, 8
    $region17: #{fused_forward.1} parent=1 // pred_fallthru
      _
    // Predicated region
    $region18: #{fused_forward.1} parent=1 // pred_check
      _
    $region19: #{fused_forward.1} parent=1 // pred_check_branch
      %56 = sbr.rel (0) target = $region21
    $region20: #{fused_forward.1} parent=1 // pred_region
      _
    $region21: #{fused_forward.1} parent=1 // pred_fallthru
      _
    // Predicated region
    $region22: #{fused_forward.1} parent=1 // pred_check
      _
    $region23: #{fused_forward.1} parent=1 // pred_check_branch
      %58 = sbr.rel (0) target = $region25
    $region24: #{fused_forward.1} parent=1 // pred_region
      %s60 = ssub.s32 2048, 2048
      %61 = vsyncadd [#allocation6], %s60
      %s62 = sshll.u32 [#allocation7], 4
      %s63 = int_to_ptr.vmem [resolvable:$true] %s62
      %68 = dma.hbm_to_vmem [thread:$0]  %s5, 2048, %s63, [#allocation6], 64, 64, 4
    $region25: #{fused_forward.1} parent=1 // pred_fallthru
      _
    // Predicated region
    $region26: #{fused_forward.1} parent=1 // pred_check
      _
    $region27: #{fused_forward.1} parent=1 // pred_check_branch
      %70 = sbr.rel (0) target = $region29
    $region28: #{fused_forward.1} parent=1 // pred_region
      _
    $region29: #{fused_forward.1} parent=1 // pred_fallthru
      _
    // Predicated region
    $region30: #{fused_forward.1} parent=1 // pred_check
      _
    $region31: #{fused_forward.1} parent=1 // pred_check_branch
      %72 = sbr.rel (0) target = $region33
    $region32: #{fused_forward.1} parent=1 // pred_region
      %s74 = ssub.s32 1024, 1024
      %75 = vsyncadd [#allocation9], %s74
      %s76 = sshll.u32 [#allocation8], 4
      %s77 = int_to_ptr.vmem [resolvable:$true] %s76
      %82 = dma.hbm_to_vmem [thread:$0]  %s7, 1024, %s77, [#allocation9], 64, 64, 4
    $region33: #{fused_forward.1} parent=1 // pred_fallthru
      _
    // Predicated region
    $region34: #{fused_forward.1} parent=1 // pred_check
      _
    $region35: #{fused_forward.1} parent=1 // pred_check_branch
      %84 = sbr.rel (0) target = $region37
    $region36: #{fused_forward.1} parent=1 // pred_region
      _
    $region37: #{fused_forward.1} parent=1 // pred_fallthru
      _
    // Predicated region
    $region38: #{fused_forward.1} parent=1 // pred_check
      _
    $region39: #{fused_forward.1} parent=1 // pred_check_branch
      %86 = sbr.rel (0) target = $region41
    $region40: #{fused_forward.1} parent=1 // pred_region
      %s88 = ssub.s32 1024, 1024
      %89 = vsyncadd [#allocation9], %s88
      %s90 = sshll.u32 [#allocation10], 4
      %s91 = int_to_ptr.vmem [resolvable:$true] %s90
      %96 = dma.hbm_to_vmem [thread:$0]  %s9, 1024, %s91, [#allocation9], 64, 64, 4
    $region41: #{fused_forward.1} parent=1 // pred_fallthru
      _
    // Predicated region
    $region42: #{fused_forward.1} parent=1 // pred_check
      _
    $region43: #{fused_forward.1} parent=1 // pred_check_branch
      %98 = sbr.rel (0) target = $region45
    $region44: #{fused_forward.1} parent=1 // pred_region
      _
    $region45: #{fused_forward.1} parent=1 // pred_fallthru
      _
    // Predicated region
    $region46: #{fused_forward.1} parent=1 // pred_check
      _
    $region47: #{fused_forward.1} parent=1 // pred_check_branch
      %100 = sbr.rel (0) target = $region49
    $region48: #{fused_forward.1} parent=1 // pred_region
      %101 = dma.done [#allocation3], 8192
    $region49: #{fused_forward.1} parent=1 // pred_fallthru
      _
    // Predicated region
    $region50: #{fused_forward.1} parent=1 // pred_check
      _
    $region51: #{fused_forward.1} parent=1 // pred_check_branch
      %103 = sbr.rel (0) target = $region53
    $region52: #{fused_forward.1} parent=1 // pred_region
      %104 = dma.done [#allocation6], 2048
    $region53: #{fused_forward.1} parent=1 // pred_fallthru
      _
    // Predicated region
    $region54: #{fused_forward.1} parent=1 // pred_check
      _
    $region55: #{fused_forward.1} parent=1 // pred_check_branch
      %106 = sbr.rel (0) target = $region57
    $region56: #{fused_forward.1} parent=1 // pred_region
      %107 = dma.done [#allocation6], 2048
    $region57: #{fused_forward.1} parent=1 // pred_fallthru
      _
    // Predicated region
    $region58: #{fused_forward.1} parent=1 // pred_check
      _
    $region59: #{fused_forward.1} parent=1 // pred_check_branch
      %109 = sbr.rel (0) target = $region61
    $region60: #{fused_forward.1} parent=1 // pred_region
      %110 = dma.done [#allocation9], 1024
    $region61: #{fused_forward.1} parent=1 // pred_fallthru
      _
    // Predicated region
    $region62: #{fused_forward.1} parent=1 // pred_check
      _
    $region63: #{fused_forward.1} parent=1 // pred_check_branch
      %112 = sbr.rel (0) target = $region65
    $region64: #{fused_forward.1} parent=1 // pred_region
      %113 = dma.done [#allocation9], 1024
    $region65: #{fused_forward.1} parent=1 // pred_fallthru
      _
    %v115 = vld [vmem:[%s0] sm:$0xff]
    %v116 = vlaneseq
    %v117 = vand.u32 %v116, 127
    %v118 = vadd.s32 %v117, 128
    %v119 = vadd.s32 %v117, 256
    %v120 = vadd.s32 %v117, 384
    %v121 = vadd.s32 %v117, 512
    %v122 = vadd.s32 %v117, 640
    %v123 = vadd.s32 %v117, 768
    %v124 = vadd.s32 %v117, 896
    %125 = vset.pattern.permute.xlu0 0
    %126 = vperm.xlu0 %125, %v115
    %v127 = vpop.permute.xlu0 %126
    %vm128 = vcmp.eq.s32.totalorder %v117, %v127
    %vm129 = vcmp.eq.s32.totalorder %v118, %v127
    %vm130 = vcmp.eq.s32.totalorder %v119, %v127
    %vm131 = vcmp.eq.s32.totalorder %v120, %v127
    %vm132 = vcmp.eq.s32.totalorder %v121, %v127
    %vm133 = vcmp.eq.s32.totalorder %v122, %v127
    %vm134 = vcmp.eq.s32.totalorder %v123, %v127
    %vm135 = vcmp.eq.s32.totalorder %v124, %v127
    %v136 = vsel %vm128, 1.0, 0.0
    %v137 = vsel %vm129, 1.0, 0.0
    %v138 = vsel %vm130, 1.0, 0.0
    %v139 = vsel %vm131, 1.0, 0.0
    %v140 = vsel %vm132, 1.0, 0.0
    %v141 = vsel %vm133, 1.0, 0.0
    %v142 = vsel %vm134, 1.0, 0.0
    %v143 = vsel %vm135, 1.0, 0.0
    %v144 = vpack.c.bf16 %v136, %v136
    %v145 = vpack.c.bf16 %v137, %v137
    %v146 = vpack.c.bf16 %v138, %v138
    %v147 = vpack.c.bf16 %v139, %v139
    %v148 = vpack.c.bf16 %v140, %v140
    %v149 = vpack.c.bf16 %v141, %v141
    %v150 = vpack.c.bf16 %v142, %v142
    %v151 = vpack.c.bf16 %v143, %v143
    %v152 = vld [vmem:[#allocation2] sm:$0xf]
    %v153 = vld [vmem:[#allocation2 + $0x4] sm:$0xf]
    %v154 = vld [vmem:[#allocation2 + $0x8] sm:$0xf]
    %v155 = vld [vmem:[#allocation2 + $0xc] sm:$0xf]
    %v156 = vld [vmem:[#allocation2 + $0x10] sm:$0xf]
    %v157 = vld [vmem:[#allocation2 + $0x14] sm:$0xf]
    %v158 = vld [vmem:[#allocation2 + $0x18] sm:$0xf]
    %v159 = vld [vmem:[#allocation2 + $0x1c] sm:$0xf]
    %v160 = vld [vmem:[#allocation2 + $0x20] sm:$0xf]
    %v161 = vld [vmem:[#allocation2 + $0x24] sm:$0xf]
    %v162 = vld [vmem:[#allocation2 + $0x28] sm:$0xf]
    %v163 = vld [vmem:[#allocation2 + $0x2c] sm:$0xf]
    %v164 = vld [vmem:[#allocation2 + $0x30] sm:$0xf]
    %v165 = vld [vmem:[#allocation2 + $0x34] sm:$0xf]
    %v166 = vld [vmem:[#allocation2 + $0x38] sm:$0xf]
    %v167 = vld [vmem:[#allocation2 + $0x3c] sm:$0xf]
    %v168 = vld [vmem:[#allocation2 + $0x40] sm:$0xf]
    %v169 = vld [vmem:[#allocation2 + $0x44] sm:$0xf]
    %v170 = vld [vmem:[#allocation2 + $0x48] sm:$0xf]
    %v171 = vld [vmem:[#allocation2 + $0x4c] sm:$0xf]
    %v172 = vld [vmem:[#allocation2 + $0x50] sm:$0xf]
    %v173 = vld [vmem:[#allocation2 + $0x54] sm:$0xf]
    %v174 = vld [vmem:[#allocation2 + $0x58] sm:$0xf]
    %v175 = vld [vmem:[#allocation2 + $0x5c] sm:$0xf]
    %v176 = vld [vmem:[#allocation2 + $0x60] sm:$0xf]
    %v177 = vld [vmem:[#allocation2 + $0x64] sm:$0xf]
    %v178 = vld [vmem:[#allocation2 + $0x68] sm:$0xf]
    %v179 = vld [vmem:[#allocation2 + $0x6c] sm:$0xf]
    %v180 = vld [vmem:[#allocation2 + $0x70] sm:$0xf]
    %v181 = vld [vmem:[#allocation2 + $0x74] sm:$0xf]
    %v182 = vld [vmem:[#allocation2 + $0x78] sm:$0xf]
    %v183 = vld [vmem:[#allocation2 + $0x7c] sm:$0xf]
    %v184 = vld [vmem:[#allocation2 + $0x80] sm:$0xf]
    %v185 = vld [vmem:[#allocation2 + $0x84] sm:$0xf]
    %v186 = vld [vmem:[#allocation2 + $0x88] sm:$0xf]
    %v187 = vld [vmem:[#allocation2 + $0x8c] sm:$0xf]
    %v188 = vld [vmem:[#allocation2 + $0x90] sm:$0xf]
    %v189 = vld [vmem:[#allocation2 + $0x94] sm:$0xf]
    %v190 = vld [vmem:[#allocation2 + $0x98] sm:$0xf]
    %v191 = vld [vmem:[#allocation2 + $0x9c] sm:$0xf]
    %v192 = vld [vmem:[#allocation2 + $0xa0] sm:$0xf]
    %v193 = vld [vmem:[#allocation2 + $0xa4] sm:$0xf]
    %v194 = vld [vmem:[#allocation2 + $0xa8] sm:$0xf]
    %v195 = vld [vmem:[#allocation2 + $0xac] sm:$0xf]
    %v196 = vld [vmem:[#allocation2 + $0xb0] sm:$0xf]
    %v197 = vld [vmem:[#allocation2 + $0xb4] sm:$0xf]
    %v198 = vld [vmem:[#allocation2 + $0xb8] sm:$0xf]
    %v199 = vld [vmem:[#allocation2 + $0xbc] sm:$0xf]
    %v200 = vld [vmem:[#allocation2 + $0xc0] sm:$0xf]
    %v201 = vld [vmem:[#allocation2 + $0xc4] sm:$0xf]
    %v202 = vld [vmem:[#allocation2 + $0xc8] sm:$0xf]
    %v203 = vld [vmem:[#allocation2 + $0xcc] sm:$0xf]
    %v204 = vld [vmem:[#allocation2 + $0xd0] sm:$0xf]
    %v205 = vld [vmem:[#allocation2 + $0xd4] sm:$0xf]
    %v206 = vld [vmem:[#allocation2 + $0xd8] sm:$0xf]
    %v207 = vld [vmem:[#allocation2 + $0xdc] sm:$0xf]
    %v208 = vld [vmem:[#allocation2 + $0xe0] sm:$0xf]
    %v209 = vld [vmem:[#allocation2 + $0xe4] sm:$0xf]
    %v210 = vld [vmem:[#allocation2 + $0xe8] sm:$0xf]
    %v211 = vld [vmem:[#allocation2 + $0xec] sm:$0xf]
    %v212 = vld [vmem:[#allocation2 + $0xf0] sm:$0xf]
    %v213 = vld [vmem:[#allocation2 + $0xf4] sm:$0xf]
    %v214 = vld [vmem:[#allocation2 + $0xf8] sm:$0xf]
    %v215 = vld [vmem:[#allocation2 + $0xfc] sm:$0xf]
    %v216 = vld [vmem:[#allocation2 + $0x100] sm:$0xf]
    %v217 = vld [vmem:[#allocation2 + $0x104] sm:$0xf]
    %v218 = vld [vmem:[#allocation2 + $0x108] sm:$0xf]
    %v219 = vld [vmem:[#allocation2 + $0x10c] sm:$0xf]
    %v220 = vld [vmem:[#allocation2 + $0x110] sm:$0xf]
    %v221 = vld [vmem:[#allocation2 + $0x114] sm:$0xf]
    %v222 = vld [vmem:[#allocation2 + $0x118] sm:$0xf]
    %v223 = vld [vmem:[#allocation2 + $0x11c] sm:$0xf]
    %v224 = vld [vmem:[#allocation2 + $0x120] sm:$0xf]
    %v225 = vld [vmem:[#allocation2 + $0x124] sm:$0xf]
    %v226 = vld [vmem:[#allocation2 + $0x128] sm:$0xf]
    %v227 = vld [vmem:[#allocation2 + $0x12c] sm:$0xf]
    %v228 = vld [vmem:[#allocation2 + $0x130] sm:$0xf]
    %v229 = vld [vmem:[#allocation2 + $0x134] sm:$0xf]
    %v230 = vld [vmem:[#allocation2 + $0x138] sm:$0xf]
    %v231 = vld [vmem:[#allocation2 + $0x13c] sm:$0xf]
    %v232 = vld [vmem:[#allocation2 + $0x140] sm:$0xf]
    %v233 = vld [vmem:[#allocation2 + $0x144] sm:$0xf]
    %v234 = vld [vmem:[#allocation2 + $0x148] sm:$0xf]
    %v235 = vld [vmem:[#allocation2 + $0x14c] sm:$0xf]
    %v236 = vld [vmem:[#allocation2 + $0x150] sm:$0xf]
    %v237 = vld [vmem:[#allocation2 + $0x154] sm:$0xf]
    %v238 = vld [vmem:[#allocation2 + $0x158] sm:$0xf]
    %v239 = vld [vmem:[#allocation2 + $0x15c] sm:$0xf]
    %v240 = vld [vmem:[#allocation2 + $0x160] sm:$0xf]
    %v241 = vld [vmem:[#allocation2 + $0x164] sm:$0xf]
    %v242 = vld [vmem:[#allocation2 + $0x168] sm:$0xf]
    %v243 = vld [vmem:[#allocation2 + $0x16c] sm:$0xf]
    %v244 = vld [vmem:[#allocation2 + $0x170] sm:$0xf]
    %v245 = vld [vmem:[#allocation2 + $0x174] sm:$0xf]
    %v246 = vld [vmem:[#allocation2 + $0x178] sm:$0xf]
    %v247 = vld [vmem:[#allocation2 + $0x17c] sm:$0xf]
    %v248 = vld [vmem:[#allocation2 + $0x180] sm:$0xf]
    %v249 = vld [vmem:[#allocation2 + $0x184] sm:$0xf]
    %v250 = vld [vmem:[#allocation2 + $0x188] sm:$0xf]
    %v251 = vld [vmem:[#allocation2 + $0x18c] sm:$0xf]
    %v252 = vld [vmem:[#allocation2 + $0x190] sm:$0xf]
    %v253 = vld [vmem:[#allocation2 + $0x194] sm:$0xf]
    %v254 = vld [vmem:[#allocation2 + $0x198] sm:$0xf]
    %v255 = vld [vmem:[#allocation2 + $0x19c] sm:$0xf]
    %v256 = vld [vmem:[#allocation2 + $0x1a0] sm:$0xf]
    %v257 = vld [vmem:[#allocation2 + $0x1a4] sm:$0xf]
    %v258 = vld [vmem:[#allocation2 + $0x1a8] sm:$0xf]
    %v259 = vld [vmem:[#allocation2 + $0x1ac] sm:$0xf]
    %v260 = vld [vmem:[#allocation2 + $0x1b0] sm:$0xf]
    %v261 = vld [vmem:[#allocation2 + $0x1b4] sm:$0xf]
    %v262 = vld [vmem:[#allocation2 + $0x1b8] sm:$0xf]
    %v263 = vld [vmem:[#allocation2 + $0x1bc] sm:$0xf]
    %v264 = vld [vmem:[#allocation2 + $0x1c0] sm:$0xf]
    %v265 = vld [vmem:[#allocation2 + $0x1c4] sm:$0xf]
    %v266 = vld [vmem:[#allocation2 + $0x1c8] sm:$0xf]
    %v267 = vld [vmem:[#allocation2 + $0x1cc] sm:$0xf]
    %v268 = vld [vmem:[#allocation2 + $0x1d0] sm:$0xf]
    %v269 = vld [vmem:[#allocation2 + $0x1d4] sm:$0xf]
    %v270 = vld [vmem:[#allocation2 + $0x1d8] sm:$0xf]
    %v271 = vld [vmem:[#allocation2 + $0x1dc] sm:$0xf]
    %v272 = vld [vmem:[#allocation2 + $0x1e0] sm:$0xf]
    %v273 = vld [vmem:[#allocation2 + $0x1e4] sm:$0xf]
    %v274 = vld [vmem:[#allocation2 + $0x1e8] sm:$0xf]
    %v275 = vld [vmem:[#allocation2 + $0x1ec] sm:$0xf]
    %v276 = vld [vmem:[#allocation2 + $0x1f0] sm:$0xf]
    %v277 = vld [vmem:[#allocation2 + $0x1f4] sm:$0xf]
    %v278 = vld [vmem:[#allocation2 + $0x1f8] sm:$0xf]
    %v279 = vld [vmem:[#allocation2 + $0x1fc] sm:$0xf]
    %v408 = vunpack.c.l.b16 %v152
    %v409 = vunpack.c.l.b16 %v153
    %v410 = vunpack.c.l.b16 %v154
    %v411 = vunpack.c.l.b16 %v155
    %v412 = vunpack.c.l.b16 %v156
    %v413 = vunpack.c.l.b16 %v157
    %v414 = vunpack.c.l.b16 %v158
    %v415 = vunpack.c.l.b16 %v159
    %v416 = vunpack.c.l.b16 %v160
    %v417 = vunpack.c.l.b16 %v161
    %v418 = vunpack.c.l.b16 %v162
    %v419 = vunpack.c.l.b16 %v163
    %v420 = vunpack.c.l.b16 %v164
    %v421 = vunpack.c.l.b16 %v165
    %v422 = vunpack.c.l.b16 %v166
    %v423 = vunpack.c.l.b16 %v167
    %v424 = vunpack.c.l.b16 %v168
    %v425 = vunpack.c.l.b16 %v169
    %v426 = vunpack.c.l.b16 %v170
    %v427 = vunpack.c.l.b16 %v171
    %v428 = vunpack.c.l.b16 %v172
    %v429 = vunpack.c.l.b16 %v173
    %v430 = vunpack.c.l.b16 %v174
    %v431 = vunpack.c.l.b16 %v175
    %v432 = vunpack.c.l.b16 %v176
    %v433 = vunpack.c.l.b16 %v177
    %v434 = vunpack.c.l.b16 %v178
    %v435 = vunpack.c.l.b16 %v179
    %v436 = vunpack.c.l.b16 %v180
    %v437 = vunpack.c.l.b16 %v181
    %v438 = vunpack.c.l.b16 %v182
    %v439 = vunpack.c.l.b16 %v183
    %v440 = vunpack.c.l.b16 %v184
    %v441 = vunpack.c.l.b16 %v185
    %v442 = vunpack.c.l.b16 %v186
    %v443 = vunpack.c.l.b16 %v187
    %v444 = vunpack.c.l.b16 %v188
    %v445 = vunpack.c.l.b16 %v189
    %v446 = vunpack.c.l.b16 %v190
    %v447 = vunpack.c.l.b16 %v191
    %v448 = vunpack.c.l.b16 %v192
    %v449 = vunpack.c.l.b16 %v193
    %v450 = vunpack.c.l.b16 %v194
    %v451 = vunpack.c.l.b16 %v195
    %v452 = vunpack.c.l.b16 %v196
    %v453 = vunpack.c.l.b16 %v197
    %v454 = vunpack.c.l.b16 %v198
    %v455 = vunpack.c.l.b16 %v199
    %v456 = vunpack.c.l.b16 %v200
    %v457 = vunpack.c.l.b16 %v201
    %v458 = vunpack.c.l.b16 %v202
    %v459 = vunpack.c.l.b16 %v203
    %v460 = vunpack.c.l.b16 %v204
    %v461 = vunpack.c.l.b16 %v205
    %v462 = vunpack.c.l.b16 %v206
    %v463 = vunpack.c.l.b16 %v207
    %v464 = vunpack.c.l.b16 %v208
    %v465 = vunpack.c.l.b16 %v209
    %v466 = vunpack.c.l.b16 %v210
    %v467 = vunpack.c.l.b16 %v211
    %v468 = vunpack.c.l.b16 %v212
    %v469 = vunpack.c.l.b16 %v213
    %v470 = vunpack.c.l.b16 %v214
    %v471 = vunpack.c.l.b16 %v215
    %v472 = vunpack.c.l.b16 %v216
    %v473 = vunpack.c.l.b16 %v217
    %v474 = vunpack.c.l.b16 %v218
    %v475 = vunpack.c.l.b16 %v219
    %v476 = vunpack.c.l.b16 %v220
    %v477 = vunpack.c.l.b16 %v221
    %v478 = vunpack.c.l.b16 %v222
    %v479 = vunpack.c.l.b16 %v223
    %v480 = vunpack.c.l.b16 %v224
    %v481 = vunpack.c.l.b16 %v225
    %v482 = vunpack.c.l.b16 %v226
    %v483 = vunpack.c.l.b16 %v227
    %v484 = vunpack.c.l.b16 %v228
    %v485 = vunpack.c.l.b16 %v229
    %v486 = vunpack.c.l.b16 %v230
    %v487 = vunpack.c.l.b16 %v231
    %v488 = vunpack.c.l.b16 %v232
    %v489 = vunpack.c.l.b16 %v233
    %v490 = vunpack.c.l.b16 %v234
    %v491 = vunpack.c.l.b16 %v235
    %v492 = vunpack.c.l.b16 %v236
    %v493 = vunpack.c.l.b16 %v237
    %v494 = vunpack.c.l.b16 %v238
    %v495 = vunpack.c.l.b16 %v239
    %v496 = vunpack.c.l.b16 %v240
    %v497 = vunpack.c.l.b16 %v241
    %v498 = vunpack.c.l.b16 %v242
    %v499 = vunpack.c.l.b16 %v243
    %v500 = vunpack.c.l.b16 %v244
    %v501 = vunpack.c.l.b16 %v245
    %v502 = vunpack.c.l.b16 %v246
    %v503 = vunpack.c.l.b16 %v247
    %v504 = vunpack.c.l.b16 %v248
    %v505 = vunpack.c.l.b16 %v249
    %v506 = vunpack.c.l.b16 %v250
    %v507 = vunpack.c.l.b16 %v251
    %v508 = vunpack.c.l.b16 %v252
    %v509 = vunpack.c.l.b16 %v253
    %v510 = vunpack.c.l.b16 %v254
    %v511 = vunpack.c.l.b16 %v255
    %v512 = vunpack.c.l.b16 %v256
    %v513 = vunpack.c.l.b16 %v257
    %v514 = vunpack.c.l.b16 %v258
    %v515 = vunpack.c.l.b16 %v259
    %v516 = vunpack.c.l.b16 %v260
    %v517 = vunpack.c.l.b16 %v261
    %v518 = vunpack.c.l.b16 %v262
    %v519 = vunpack.c.l.b16 %v263
    %v520 = vunpack.c.l.b16 %v264
    %v521 = vunpack.c.l.b16 %v265
    %v522 = vunpack.c.l.b16 %v266
    %v523 = vunpack.c.l.b16 %v267
    %v524 = vunpack.c.l.b16 %v268
    %v525 = vunpack.c.l.b16 %v269
    %v526 = vunpack.c.l.b16 %v270
    %v527 = vunpack.c.l.b16 %v271
    %v528 = vunpack.c.l.b16 %v272
    %v529 = vunpack.c.l.b16 %v273
    %v530 = vunpack.c.l.b16 %v274
    %v531 = vunpack.c.l.b16 %v275
    %v532 = vunpack.c.l.b16 %v276
    %v533 = vunpack.c.l.b16 %v277
    %v534 = vunpack.c.l.b16 %v278
    %v535 = vunpack.c.l.b16 %v279
    %v536 = vpack.c.b16 %v409, %v408
    %v537 = vpack.c.b16 %v411, %v410
    %v538 = vpack.c.b16 %v413, %v412
    %v539 = vpack.c.b16 %v415, %v414
    %v540 = vpack.c.b16 %v417, %v416
    %v541 = vpack.c.b16 %v419, %v418
    %v542 = vpack.c.b16 %v421, %v420
    %v543 = vpack.c.b16 %v423, %v422
    %v544 = vpack.c.b16 %v425, %v424
    %v545 = vpack.c.b16 %v427, %v426
    %v546 = vpack.c.b16 %v429, %v428
    %v547 = vpack.c.b16 %v431, %v430
    %v548 = vpack.c.b16 %v433, %v432
    %v549 = vpack.c.b16 %v435, %v434
    %v550 = vpack.c.b16 %v437, %v436
    %v551 = vpack.c.b16 %v439, %v438
    %v552 = vpack.c.b16 %v441, %v440
    %v553 = vpack.c.b16 %v443, %v442
    %v554 = vpack.c.b16 %v445, %v444
    %v555 = vpack.c.b16 %v447, %v446
    %v556 = vpack.c.b16 %v449, %v448
    %v557 = vpack.c.b16 %v451, %v450
    %v558 = vpack.c.b16 %v453, %v452
    %v559 = vpack.c.b16 %v455, %v454
    %v560 = vpack.c.b16 %v457, %v456
    %v561 = vpack.c.b16 %v459, %v458
    %v562 = vpack.c.b16 %v461, %v460
    %v563 = vpack.c.b16 %v463, %v462
    %v564 = vpack.c.b16 %v465, %v464
    %v565 = vpack.c.b16 %v467, %v466
    %v566 = vpack.c.b16 %v469, %v468
    %v567 = vpack.c.b16 %v471, %v470
    %v568 = vpack.c.b16 %v473, %v472
    %v569 = vpack.c.b16 %v475, %v474
    %v570 = vpack.c.b16 %v477, %v476
    %v571 = vpack.c.b16 %v479, %v478
    %v572 = vpack.c.b16 %v481, %v480
    %v573 = vpack.c.b16 %v483, %v482
    %v574 = vpack.c.b16 %v485, %v484
    %v575 = vpack.c.b16 %v487, %v486
    %v576 = vpack.c.b16 %v489, %v488
    %v577 = vpack.c.b16 %v491, %v490
    %v578 = vpack.c.b16 %v493, %v492
    %v579 = vpack.c.b16 %v495, %v494
    %v580 = vpack.c.b16 %v497, %v496
    %v581 = vpack.c.b16 %v499, %v498
    %v582 = vpack.c.b16 %v501, %v500
    %v583 = vpack.c.b16 %v503, %v502
    %v584 = vpack.c.b16 %v505, %v504
    %v585 = vpack.c.b16 %v507, %v506
    %v586 = vpack.c.b16 %v509, %v508
    %v587 = vpack.c.b16 %v511, %v510
    %v588 = vpack.c.b16 %v513, %v512
    %v589 = vpack.c.b16 %v515, %v514
    %v590 = vpack.c.b16 %v517, %v516
    %v591 = vpack.c.b16 %v519, %v518
    %v592 = vpack.c.b16 %v521, %v520
    %v593 = vpack.c.b16 %v523, %v522
    %v594 = vpack.c.b16 %v525, %v524
    %v595 = vpack.c.b16 %v527, %v526
    %v596 = vpack.c.b16 %v529, %v528
    %v597 = vpack.c.b16 %v531, %v530
    %v598 = vpack.c.b16 %v533, %v532
    %v599 = vpack.c.b16 %v535, %v534
    %664 = vmatprep.subr.bf16.mxu0 0
    %665 = vmatpush1.bf16.msra.mxu0 %v536
    %666 = vmatprep.subr.bf16.mxu0 0
    %667 = vmatpush1.bf16.msra.mxu0 %v537
    %668 = vmatprep.subr.bf16.mxu0 0
    %669 = vmatpush1.bf16.msra.mxu0 %v538
    %670 = vmatprep.subr.bf16.mxu0 0
    %671 = vmatpush1.bf16.msra.mxu0 %v539
    %672 = vmatprep.subr.bf16.mxu0 0
    %673 = vmatpush1.bf16.msra.mxu0 %v540
    %674 = vmatprep.subr.bf16.mxu0 0
    %675 = vmatpush1.bf16.msra.mxu0 %v541
    %676 = vmatprep.subr.bf16.mxu0 0
    %677 = vmatpush1.bf16.msra.mxu0 %v542
    %678 = vmatprep.subr.bf16.mxu0 0
    %679 = vmatpush1.bf16.msra.mxu0 %v543
    %680 = vmatprep.subr.bf16.mxu0 0
    %681 = vmatpush1.bf16.msra.mxu0 %v544
    %682 = vmatprep.subr.bf16.mxu0 0
    %683 = vmatpush1.bf16.msra.mxu0 %v545
    %684 = vmatprep.subr.bf16.mxu0 0
    %685 = vmatpush1.bf16.msra.mxu0 %v546
    %686 = vmatprep.subr.bf16.mxu0 0
    %687 = vmatpush1.bf16.msra.mxu0 %v547
    %688 = vmatprep.subr.bf16.mxu0 0
    %689 = vmatpush1.bf16.msra.mxu0 %v548
    %690 = vmatprep.subr.bf16.mxu0 0
    %691 = vmatpush1.bf16.msra.mxu0 %v549
    %692 = vmatprep.subr.bf16.mxu0 0
    %693 = vmatpush1.bf16.msra.mxu0 %v550
    %694 = vmatprep.subr.bf16.mxu0 0
    %695 = vmatpush1.bf16.msra.mxu0 %v551
    %696 = vmatprep.mubr.bf16.mxu0 %v145
    %697 = vmatmul.mubr.bf16.gmra.mrb[0].mxu0 %v144
    %v698 = vpop.f32.mrb[0].mxu0
    %v699 = vadd.f32 0.0, %v698
    %v700 = vpop.f32.mrb[0].mxu0
    %v701 = vpop.f32.mrb[0].mxu0
    %v702 = vpop.f32.mrb[0].mxu0
    %703 = vdwg.mxu0
    %704 = vmatprep.subr.bf16.mxu0 0
    %705 = vmatpush1.bf16.msra.mxu0 %v552
    %706 = vmatprep.subr.bf16.mxu0 0
    %707 = vmatpush1.bf16.msra.mxu0 %v553
    %708 = vmatprep.subr.bf16.mxu0 0
    %709 = vmatpush1.bf16.msra.mxu0 %v554
    %710 = vmatprep.subr.bf16.mxu0 0
    %711 = vmatpush1.bf16.msra.mxu0 %v555
    %712 = vmatprep.subr.bf16.mxu0 0
    %713 = vmatpush1.bf16.msra.mxu0 %v556
    %714 = vmatprep.subr.bf16.mxu0 0
    %715 = vmatpush1.bf16.msra.mxu0 %v557
    %716 = vmatprep.subr.bf16.mxu0 0
    %717 = vmatpush1.bf16.msra.mxu0 %v558
    %718 = vmatprep.subr.bf16.mxu0 0
    %719 = vmatpush1.bf16.msra.mxu0 %v559
    %720 = vmatprep.subr.bf16.mxu0 0
    %721 = vmatpush1.bf16.msra.mxu0 %v560
    %722 = vmatprep.subr.bf16.mxu0 0
    %723 = vmatpush1.bf16.msra.mxu0 %v561
    %724 = vmatprep.subr.bf16.mxu0 0
    %725 = vmatpush1.bf16.msra.mxu0 %v562
    %726 = vmatprep.subr.bf16.mxu0 0
    %727 = vmatpush1.bf16.msra.mxu0 %v563
    %728 = vmatprep.subr.bf16.mxu0 0
    %729 = vmatpush1.bf16.msra.mxu0 %v564
    %730 = vmatprep.subr.bf16.mxu0 0
    %731 = vmatpush1.bf16.msra.mxu0 %v565
    %732 = vmatprep.subr.bf16.mxu0 0
    %733 = vmatpush1.bf16.msra.mxu0 %v566
    %734 = vmatprep.subr.bf16.mxu0 0
    %735 = vmatpush1.bf16.msra.mxu0 %v567
    %736 = vmatprep.mubr.bf16.mxu0 %v147
    %737 = vmatmul.mubr.bf16.gmra.mrb[0].mxu0 %v146
    %v738 = vpop.f32.mrb[0].mxu0
    %v739 = vadd.f32 %v699, %v738
    %v740 = vpop.f32.mrb[0].mxu0
    %v741 = vpop.f32.mrb[0].mxu0
    %v742 = vpop.f32.mrb[0].mxu0
    %743 = vdwg.mxu0
    %744 = vmatprep.subr.bf16.mxu0 0
    %745 = vmatpush1.bf16.msra.mxu0 %v568
    %746 = vmatprep.subr.bf16.mxu0 0
    %747 = vmatpush1.bf16.msra.mxu0 %v569
    %748 = vmatprep.subr.bf16.mxu0 0
    %749 = vmatpush1.bf16.msra.mxu0 %v570
    %750 = vmatprep.subr.bf16.mxu0 0
    %751 = vmatpush1.bf16.msra.mxu0 %v571
    %752 = vmatprep.subr.bf16.mxu0 0
    %753 = vmatpush1.bf16.msra.mxu0 %v572
    %754 = vmatprep.subr.bf16.mxu0 0
    %755 = vmatpush1.bf16.msra.mxu0 %v573
    %756 = vmatprep.subr.bf16.mxu0 0
    %757 = vmatpush1.bf16.msra.mxu0 %v574
    %758 = vmatprep.subr.bf16.mxu0 0
    %759 = vmatpush1.bf16.msra.mxu0 %v575
    %760 = vmatprep.subr.bf16.mxu0 0
    %761 = vmatpush1.bf16.msra.mxu0 %v576
    %762 = vmatprep.subr.bf16.mxu0 0
    %763 = vmatpush1.bf16.msra.mxu0 %v577
    %764 = vmatprep.subr.bf16.mxu0 0
    %765 = vmatpush1.bf16.msra.mxu0 %v578
    %766 = vmatprep.subr.bf16.mxu0 0
    %767 = vmatpush1.bf16.msra.mxu0 %v579
    %768 = vmatprep.subr.bf16.mxu0 0
    %769 = vmatpush1.bf16.msra.mxu0 %v580
    %770 = vmatprep.subr.bf16.mxu0 0
    %771 = vmatpush1.bf16.msra.mxu0 %v581
    %772 = vmatprep.subr.bf16.mxu0 0
    %773 = vmatpush1.bf16.msra.mxu0 %v582
    %774 = vmatprep.subr.bf16.mxu0 0
    %775 = vmatpush1.bf16.msra.mxu0 %v583
    %776 = vmatprep.mubr.bf16.mxu0 %v149
    %777 = vmatmul.mubr.bf16.gmra.mrb[0].mxu0 %v148
    %v778 = vpop.f32.mrb[0].mxu0
    %v779 = vadd.f32 %v739, %v778
    %v780 = vpop.f32.mrb[0].mxu0
    %v781 = vpop.f32.mrb[0].mxu0
    %v782 = vpop.f32.mrb[0].mxu0
    %783 = vdwg.mxu0
    %784 = vmatprep.subr.bf16.mxu0 0
    %785 = vmatpush1.bf16.msra.mxu0 %v584
    %786 = vmatprep.subr.bf16.mxu0 0
    %787 = vmatpush1.bf16.msra.mxu0 %v585
    %788 = vmatprep.subr.bf16.mxu0 0
    %789 = vmatpush1.bf16.msra.mxu0 %v586
    %790 = vmatprep.subr.bf16.mxu0 0
    %791 = vmatpush1.bf16.msra.mxu0 %v587
    %792 = vmatprep.subr.bf16.mxu0 0
    %793 = vmatpush1.bf16.msra.mxu0 %v588
    %794 = vmatprep.subr.bf16.mxu0 0
    %795 = vmatpush1.bf16.msra.mxu0 %v589
    %796 = vmatprep.subr.bf16.mxu0 0
    %797 = vmatpush1.bf16.msra.mxu0 %v590
    %798 = vmatprep.subr.bf16.mxu0 0
    %799 = vmatpush1.bf16.msra.mxu0 %v591
    %800 = vmatprep.subr.bf16.mxu0 0
    %801 = vmatpush1.bf16.msra.mxu0 %v592
    %802 = vmatprep.subr.bf16.mxu0 0
    %803 = vmatpush1.bf16.msra.mxu0 %v593
    %804 = vmatprep.subr.bf16.mxu0 0
    %805 = vmatpush1.bf16.msra.mxu0 %v594
    %806 = vmatprep.subr.bf16.mxu0 0
    %807 = vmatpush1.bf16.msra.mxu0 %v595
    %808 = vmatprep.subr.bf16.mxu0 0
    %809 = vmatpush1.bf16.msra.mxu0 %v596
    %810 = vmatprep.subr.bf16.mxu0 0
    %811 = vmatpush1.bf16.msra.mxu0 %v597
    %812 = vmatprep.subr.bf16.mxu0 0
    %813 = vmatpush1.bf16.msra.mxu0 %v598
    %814 = vmatprep.subr.bf16.mxu0 0
    %815 = vmatpush1.bf16.msra.mxu0 %v599
    %816 = vmatprep.mubr.bf16.mxu0 %v151
    %817 = vmatmul.mubr.bf16.gmra.mrb[0].mxu0 %v150
    %v818 = vpop.f32.mrb[0].mxu0
    %v819 = vadd.f32 %v779, %v818
    %v820 = vpop.f32.mrb[0].mxu0
    %v821 = vpop.f32.mrb[0].mxu0
    %v822 = vpop.f32.mrb[0].mxu0
    %823 = vdwg.mxu0
    %824 = vst [vmem:[#allocation11] sm:$0xff] %v819
    %v825 = vld [vmem:[%s1] sm:$0x1]
    %v826 = vlaneseq
    %v827 = vshrl.u32 %v826, 7
    %v828 = vsub.s32 0, %v827
    %v829 = vrot.slane %v825, %v828
    %831 = vbcast.lane.b32.xlu0 %v829, 256
    %v832 = vpop.permute.xlu0 %831
    %v833 = vmul.f32 %v819, %v832
    %v834 = vrot.slane %v833, 4
    %v835 = vadd.f32 %v833, %v834
    %v836 = vrot.slane %v835, 2
    %v837 = vadd.f32 %v835, %v836
    %v838 = vrot.slane %v837, 1
    %v839 = vadd.f32 %v837, %v838
    %vm840 = vcmask 57344
    %v841 = vsel %vm840, %v825, 0.0
    %842 = vadd.xlane.f32.xlu0 %v841
    %v843 = vpop.xlane.xlu0 %842
    %v844 = vmax.f32 %v843, 1e-09
    %v845 = vrcp.pop %v844
    %v846 = vmul.f32 %v839, %v845
    %847 = vst [vmem:[#allocation12] sm:$0x1] %v846
    %v848 = vpack.c.bf16 %v846, %v846
    %v849 = vld [vmem:[#allocation5] sm:$0xff]
    %v850 = vld [vmem:[#allocation5 + $0x8] sm:$0xff]
    %v851 = vld [vmem:[#allocation5 + $0x10] sm:$0xff]
    %v852 = vld [vmem:[#allocation5 + $0x18] sm:$0xff]
    %v853 = vld [vmem:[#allocation5 + $0x20] sm:$0xff]
    %v854 = vld [vmem:[#allocation5 + $0x28] sm:$0xff]
    %v855 = vld [vmem:[#allocation5 + $0x30] sm:$0xff]
    %v856 = vld [vmem:[#allocation5 + $0x38] sm:$0xff]
    %v857 = vld [vmem:[#allocation5 + $0x40] sm:$0xff]
    %v858 = vld [vmem:[#allocation5 + $0x48] sm:$0xff]
    %v859 = vld [vmem:[#allocation5 + $0x50] sm:$0xff]
    %v860 = vld [vmem:[#allocation5 + $0x58] sm:$0xff]
    %v861 = vld [vmem:[#allocation5 + $0x60] sm:$0xff]
    %v862 = vld [vmem:[#allocation5 + $0x68] sm:$0xff]
    %v863 = vld [vmem:[#allocation5 + $0x70] sm:$0xff]
    %v864 = vld [vmem:[#allocation5 + $0x78] sm:$0xff]
    %v865 = vld [vmem:[%s4] sm:$0x3]
    %v882 = vunpack.c.l.b16 %v849
    %v883 = vunpack.c.h.b16 %v849
    %v884 = vunpack.c.l.b16 %v850
    %v885 = vunpack.c.h.b16 %v850
    %v886 = vunpack.c.l.b16 %v851
    %v887 = vunpack.c.h.b16 %v851
    %v888 = vunpack.c.l.b16 %v852
    %v889 = vunpack.c.h.b16 %v852
    %v890 = vunpack.c.l.b16 %v853
    %v891 = vunpack.c.h.b16 %v853
    %v892 = vunpack.c.l.b16 %v854
    %v893 = vunpack.c.h.b16 %v854
    %v894 = vunpack.c.l.b16 %v855
    %v895 = vunpack.c.h.b16 %v855
    %v896 = vunpack.c.l.b16 %v856
    %v897 = vunpack.c.h.b16 %v856
    %v898 = vunpack.c.l.b16 %v857
    %v899 = vunpack.c.h.b16 %v857
    %v900 = vunpack.c.l.b16 %v858
    %v901 = vunpack.c.h.b16 %v858
    %v902 = vunpack.c.l.b16 %v859
    %v903 = vunpack.c.h.b16 %v859
    %v904 = vunpack.c.l.b16 %v860
    %v905 = vunpack.c.h.b16 %v860
    %v906 = vunpack.c.l.b16 %v861
    %v907 = vunpack.c.h.b16 %v861
    %v908 = vunpack.c.l.b16 %v862
    %v909 = vunpack.c.h.b16 %v862
    %v910 = vunpack.c.l.b16 %v863
    %v911 = vunpack.c.h.b16 %v863
    %v912 = vunpack.c.l.b16 %v864
    %v913 = vunpack.c.h.b16 %v864
    %v914 = vpack.c.b16 %v884, %v882
    %v915 = vpack.c.b16 %v885, %v883
    %v916 = vpack.c.b16 %v888, %v886
    %v917 = vpack.c.b16 %v889, %v887
    %v918 = vpack.c.b16 %v892, %v890
    %v919 = vpack.c.b16 %v893, %v891
    %v920 = vpack.c.b16 %v896, %v894
    %v921 = vpack.c.b16 %v897, %v895
    %v922 = vpack.c.b16 %v900, %v898
    %v923 = vpack.c.b16 %v901, %v899
    %v924 = vpack.c.b16 %v904, %v902
    %v925 = vpack.c.b16 %v905, %v903
    %v926 = vpack.c.b16 %v908, %v906
    %v927 = vpack.c.b16 %v909, %v907
    %v928 = vpack.c.b16 %v912, %v910
    %v929 = vpack.c.b16 %v913, %v911
    %v947 = vlaneseq
    %v948 = vshrl.u32 %v947, 7
    %v949 = vsub.s32 0, %v948
    %v950 = vrot.slane %v865, %v949
    %v951 = vlaneseq
    %v952 = vshrl.u32 %v951, 7
    %v953 = vsub.s32 1, %v952
    %v954 = vrot.slane %v865, %v953
    %957 = vmatprep.subr.bf16.mxu0 %v915
    %958 = vmatpush1.bf16.msra.mxu0 %v914
    %959 = vmatprep.subr.bf16.mxu0 %v917
    %960 = vmatpush1.bf16.msra.mxu0 %v916
    %961 = vmatprep.subr.bf16.mxu0 %v919
    %962 = vmatpush1.bf16.msra.mxu0 %v918
    %963 = vmatprep.subr.bf16.mxu0 %v921
    %964 = vmatpush1.bf16.msra.mxu0 %v920
    %965 = vmatprep.subr.bf16.mxu0 %v923
    %966 = vmatpush1.bf16.msra.mxu0 %v922
    %967 = vmatprep.subr.bf16.mxu0 %v925
    %968 = vmatpush1.bf16.msra.mxu0 %v924
    %969 = vmatprep.subr.bf16.mxu0 %v927
    %970 = vmatpush1.bf16.msra.mxu0 %v926
    %971 = vmatprep.subr.bf16.mxu0 %v929
    %972 = vmatpush1.bf16.msra.mxu0 %v928
    %973 = vmatprep.subr.bf16.mxu0 0
    %974 = vmatpush1.bf16.msra.mxu0 0
    %975 = vmatprep.subr.bf16.mxu0 0
    %976 = vmatpush1.bf16.msra.mxu0 0
    %977 = vmatprep.subr.bf16.mxu0 0
    %978 = vmatpush1.bf16.msra.mxu0 0
    %979 = vmatprep.subr.bf16.mxu0 0
    %980 = vmatpush1.bf16.msra.mxu0 0
    %981 = vmatprep.subr.bf16.mxu0 0
    %982 = vmatpush1.bf16.msra.mxu0 0
    %983 = vmatprep.subr.bf16.mxu0 0
    %984 = vmatpush1.bf16.msra.mxu0 0
    %985 = vmatprep.subr.bf16.mxu0 0
    %986 = vmatpush1.bf16.msra.mxu0 0
    %987 = vmatprep.subr.bf16.mxu0 0
    %988 = vmatpush1.bf16.msra.mxu0 0
    %989 = vmatprep.mubr.bf16.mxu0 0
    %990 = vmatmul.mubr.bf16.gmra.mrb[0].mxu0 %v848
    %v991 = vpop.f32.mrb[0].mxu0
    %v992 = vadd.f32 %v950, %v991
    %v993 = vpop.f32.mrb[0].mxu0
    %v994 = vadd.f32 %v954, %v993
    %v995 = vpop.f32.mrb[0].mxu0
    %v996 = vpop.f32.mrb[0].mxu0
    %997 = vdwg.mxu0
    %v998 = vmax.f32 %v992, 0.0
    %v999 = vmax.f32 %v994, 0.0
    %v1000 = vpack.c.bf16 %v998, %v998
    %v1001 = vpack.c.bf16 %v999, %v999
    %v1002 = vld [vmem:[#allocation7] sm:$0xf]
    %v1003 = vld [vmem:[#allocation7 + $0x4] sm:$0xf]
    %v1004 = vld [vmem:[#allocation7 + $0x8] sm:$0xf]
    %v1005 = vld [vmem:[#allocation7 + $0xc] sm:$0xf]
    %v1006 = vld [vmem:[#allocation7 + $0x10] sm:$0xf]
    %v1007 = vld [vmem:[#allocation7 + $0x14] sm:$0xf]
    %v1008 = vld [vmem:[#allocation7 + $0x18] sm:$0xf]
    %v1009 = vld [vmem:[#allocation7 + $0x1c] sm:$0xf]
    %v1010 = vld [vmem:[#allocation7 + $0x20] sm:$0xf]
    %v1011 = vld [vmem:[#allocation7 + $0x24] sm:$0xf]
    %v1012 = vld [vmem:[#allocation7 + $0x28] sm:$0xf]
    %v1013 = vld [vmem:[#allocation7 + $0x2c] sm:$0xf]
    %v1014 = vld [vmem:[#allocation7 + $0x30] sm:$0xf]
    %v1015 = vld [vmem:[#allocation7 + $0x34] sm:$0xf]
    %v1016 = vld [vmem:[#allocation7 + $0x38] sm:$0xf]
    %v1017 = vld [vmem:[#allocation7 + $0x3c] sm:$0xf]
    %v1018 = vld [vmem:[#allocation7 + $0x40] sm:$0xf]
    %v1019 = vld [vmem:[#allocation7 + $0x44] sm:$0xf]
    %v1020 = vld [vmem:[#allocation7 + $0x48] sm:$0xf]
    %v1021 = vld [vmem:[#allocation7 + $0x4c] sm:$0xf]
    %v1022 = vld [vmem:[#allocation7 + $0x50] sm:$0xf]
    %v1023 = vld [vmem:[#allocation7 + $0x54] sm:$0xf]
    %v1024 = vld [vmem:[#allocation7 + $0x58] sm:$0xf]
    %v1025 = vld [vmem:[#allocation7 + $0x5c] sm:$0xf]
    %v1026 = vld [vmem:[#allocation7 + $0x60] sm:$0xf]
    %v1027 = vld [vmem:[#allocation7 + $0x64] sm:$0xf]
    %v1028 = vld [vmem:[#allocation7 + $0x68] sm:$0xf]
    %v1029 = vld [vmem:[#allocation7 + $0x6c] sm:$0xf]
    %v1030 = vld [vmem:[#allocation7 + $0x70] sm:$0xf]
    %v1031 = vld [vmem:[#allocation7 + $0x74] sm:$0xf]
    %v1032 = vld [vmem:[#allocation7 + $0x78] sm:$0xf]
    %v1033 = vld [vmem:[#allocation7 + $0x7c] sm:$0xf]
    %v1034 = vld [vmem:[%s6] sm:$0x1]
    %v1067 = vunpack.c.l.b16 %v1002
    %v1068 = vunpack.c.l.b16 %v1003
    %v1069 = vunpack.c.l.b16 %v1004
    %v1070 = vunpack.c.l.b16 %v1005
    %v1071 = vunpack.c.l.b16 %v1006
    %v1072 = vunpack.c.l.b16 %v1007
    %v1073 = vunpack.c.l.b16 %v1008
    %v1074 = vunpack.c.l.b16 %v1009
    %v1075 = vunpack.c.l.b16 %v1010
    %v1076 = vunpack.c.l.b16 %v1011
    %v1077 = vunpack.c.l.b16 %v1012
    %v1078 = vunpack.c.l.b16 %v1013
    %v1079 = vunpack.c.l.b16 %v1014
    %v1080 = vunpack.c.l.b16 %v1015
    %v1081 = vunpack.c.l.b16 %v1016
    %v1082 = vunpack.c.l.b16 %v1017
    %v1083 = vunpack.c.l.b16 %v1018
    %v1084 = vunpack.c.l.b16 %v1019
    %v1085 = vunpack.c.l.b16 %v1020
    %v1086 = vunpack.c.l.b16 %v1021
    %v1087 = vunpack.c.l.b16 %v1022
    %v1088 = vunpack.c.l.b16 %v1023
    %v1089 = vunpack.c.l.b16 %v1024
    %v1090 = vunpack.c.l.b16 %v1025
    %v1091 = vunpack.c.l.b16 %v1026
    %v1092 = vunpack.c.l.b16 %v1027
    %v1093 = vunpack.c.l.b16 %v1028
    %v1094 = vunpack.c.l.b16 %v1029
    %v1095 = vunpack.c.l.b16 %v1030
    %v1096 = vunpack.c.l.b16 %v1031
    %v1097 = vunpack.c.l.b16 %v1032
    %v1098 = vunpack.c.l.b16 %v1033
    %v1099 = vpack.c.b16 %v1068, %v1067
    %v1100 = vpack.c.b16 %v1070, %v1069
    %v1101 = vpack.c.b16 %v1072, %v1071
    %v1102 = vpack.c.b16 %v1074, %v1073
    %v1103 = vpack.c.b16 %v1076, %v1075
    %v1104 = vpack.c.b16 %v1078, %v1077
    %v1105 = vpack.c.b16 %v1080, %v1079
    %v1106 = vpack.c.b16 %v1082, %v1081
    %v1107 = vpack.c.b16 %v1084, %v1083
    %v1108 = vpack.c.b16 %v1086, %v1085
    %v1109 = vpack.c.b16 %v1088, %v1087
    %v1110 = vpack.c.b16 %v1090, %v1089
    %v1111 = vpack.c.b16 %v1092, %v1091
    %v1112 = vpack.c.b16 %v1094, %v1093
    %v1113 = vpack.c.b16 %v1096, %v1095
    %v1114 = vpack.c.b16 %v1098, %v1097
    %1131 = vmatprep.subr.bf16.mxu0 0
    %1132 = vmatpush1.bf16.msra.mxu0 %v1099
    %1133 = vmatprep.subr.bf16.mxu0 0
    %1134 = vmatpush1.bf16.msra.mxu0 %v1100
    %1135 = vmatprep.subr.bf16.mxu0 0
    %1136 = vmatpush1.bf16.msra.mxu0 %v1101
    %1137 = vmatprep.subr.bf16.mxu0 0
    %1138 = vmatpush1.bf16.msra.mxu0 %v1102
    %1139 = vmatprep.subr.bf16.mxu0 0
    %1140 = vmatpush1.bf16.msra.mxu0 %v1103
    %1141 = vmatprep.subr.bf16.mxu0 0
    %1142 = vmatpush1.bf16.msra.mxu0 %v1104
    %1143 = vmatprep.subr.bf16.mxu0 0
    %1144 = vmatpush1.bf16.msra.mxu0 %v1105
    %1145 = vmatprep.subr.bf16.mxu0 0
    %1146 = vmatpush1.bf16.msra.mxu0 %v1106
    %1147 = vmatprep.subr.bf16.mxu0 0
    %1148 = vmatpush1.bf16.msra.mxu0 %v1107
    %1149 = vmatprep.subr.bf16.mxu0 0
    %1150 = vmatpush1.bf16.msra.mxu0 %v1108
    %1151 = vmatprep.subr.bf16.mxu0 0
    %1152 = vmatpush1.bf16.msra.mxu0 %v1109
    %1153 = vmatprep.subr.bf16.mxu0 0
    %1154 = vmatpush1.bf16.msra.mxu0 %v1110
    %1155 = vmatprep.subr.bf16.mxu0 0
    %1156 = vmatpush1.bf16.msra.mxu0 %v1111
    %1157 = vmatprep.subr.bf16.mxu0 0
    %1158 = vmatpush1.bf16.msra.mxu0 %v1112
    %1159 = vmatprep.subr.bf16.mxu0 0
    %1160 = vmatpush1.bf16.msra.mxu0 %v1113
    %1161 = vmatprep.subr.bf16.mxu0 0
    %1162 = vmatpush1.bf16.msra.mxu0 %v1114
    %1163 = vmatprep.mubr.bf16.mxu0 %v1001
    %1164 = vmatmul.mubr.bf16.gmra.mrb[0].mxu0 %v1000
    %v1165 = vpop.f32.mrb[0].mxu0
    %v1166 = vadd.f32 %v1034, %v1165
    %v1167 = vpop.f32.mrb[0].mxu0
    %v1168 = vpop.f32.mrb[0].mxu0
    %v1169 = vpop.f32.mrb[0].mxu0
    %1170 = vdwg.mxu0
    %1171 = vst [vmem:[#allocation14] sm:$0x1] %v1166
    %vm1172 = vcmp.lt.s32.totalorder %v117, 2
    %v1173 = vsel %vm1172, %v1166, -1e+30
    %v1174 = vcvt.s32.f32 %v117
    %vm1175 = vcmask 1040384
    %v1176 = vsel %vm1175, %v1173, -inf
    %1177 = vmax.xlane.f32.xlu0 %v1176
    %v1178 = vpop.xlane.xlu0 %1177
    %vm1179 = vcmp.ge.f32.partialorder %v1173, %v1178
    %v1180 = vsel %vm1179, %v1174, 128.0
    %v1181 = vsel %vm1175, %v1180, inf
    %1182 = vmin.xlane.f32.xlu0 %v1181
    %v1183 = vpop.xlane.xlu0 %1182
    %v1184 = vcvt.f32.s32.to.zero.pseudo %v1183
    %vm1185 = vcmask 0
    %1186 = vst.msk [vmem:[#allocation17] sm:$0x1] %vm1185, %v1184
    %v1187 = vld [vmem:[#allocation8] sm:$0xf]
    %v1188 = vld [vmem:[#allocation8 + $0x4] sm:$0xf]
    %v1189 = vld [vmem:[#allocation8 + $0x8] sm:$0xf]
    %v1190 = vld [vmem:[#allocation8 + $0xc] sm:$0xf]
    %v1191 = vld [vmem:[#allocation8 + $0x10] sm:$0xf]
    %v1192 = vld [vmem:[#allocation8 + $0x14] sm:$0xf]
    %v1193 = vld [vmem:[#allocation8 + $0x18] sm:$0xf]
    %v1194 = vld [vmem:[#allocation8 + $0x1c] sm:$0xf]
    %v1195 = vld [vmem:[#allocation8 + $0x20] sm:$0xf]
    %v1196 = vld [vmem:[#allocation8 + $0x24] sm:$0xf]
    %v1197 = vld [vmem:[#allocation8 + $0x28] sm:$0xf]
    %v1198 = vld [vmem:[#allocation8 + $0x2c] sm:$0xf]
    %v1199 = vld [vmem:[#allocation8 + $0x30] sm:$0xf]
    %v1200 = vld [vmem:[#allocation8 + $0x34] sm:$0xf]
    %v1201 = vld [vmem:[#allocation8 + $0x38] sm:$0xf]
    %v1202 = vld [vmem:[#allocation8 + $0x3c] sm:$0xf]
    %v1203 = vld [vmem:[%s8] sm:$0x1]
    %v1220 = vunpack.c.l.b16 %v1187
    %v1221 = vunpack.c.l.b16 %v1188
    %v1222 = vunpack.c.l.b16 %v1189
    %v1223 = vunpack.c.l.b16 %v1190
    %v1224 = vunpack.c.l.b16 %v1191
    %v1225 = vunpack.c.l.b16 %v1192
    %v1226 = vunpack.c.l.b16 %v1193
    %v1227 = vunpack.c.l.b16 %v1194
    %v1228 = vunpack.c.l.b16 %v1195
    %v1229 = vunpack.c.l.b16 %v1196
    %v1230 = vunpack.c.l.b16 %v1197
    %v1231 = vunpack.c.l.b16 %v1198
    %v1232 = vunpack.c.l.b16 %v1199
    %v1233 = vunpack.c.l.b16 %v1200
    %v1234 = vunpack.c.l.b16 %v1201
    %v1235 = vunpack.c.l.b16 %v1202
    %v1236 = vpack.c.b16 %v1221, %v1220
    %v1237 = vpack.c.b16 %v1223, %v1222
    %v1238 = vpack.c.b16 %v1225, %v1224
    %v1239 = vpack.c.b16 %v1227, %v1226
    %v1240 = vpack.c.b16 %v1229, %v1228
    %v1241 = vpack.c.b16 %v1231, %v1230
    %v1242 = vpack.c.b16 %v1233, %v1232
    %v1243 = vpack.c.b16 %v1235, %v1234
    %1252 = vmatprep.subr.bf16.mxu0 0
    %1253 = vmatpush1.bf16.msra.mxu0 %v1236
    %1254 = vmatprep.subr.bf16.mxu0 0
    %1255 = vmatpush1.bf16.msra.mxu0 %v1237
    %1256 = vmatprep.subr.bf16.mxu0 0
    %1257 = vmatpush1.bf16.msra.mxu0 %v1238
    %1258 = vmatprep.subr.bf16.mxu0 0
    %1259 = vmatpush1.bf16.msra.mxu0 %v1239
    %1260 = vmatprep.subr.bf16.mxu0 0
    %1261 = vmatpush1.bf16.msra.mxu0 %v1240
    %1262 = vmatprep.subr.bf16.mxu0 0
    %1263 = vmatpush1.bf16.msra.mxu0 %v1241
    %1264 = vmatprep.subr.bf16.mxu0 0
    %1265 = vmatpush1.bf16.msra.mxu0 %v1242
    %1266 = vmatprep.subr.bf16.mxu0 0
    %1267 = vmatpush1.bf16.msra.mxu0 %v1243
    %1268 = vmatprep.subr.bf16.mxu0 0
    %1269 = vmatpush1.bf16.msra.mxu0 0
    %1270 = vmatprep.subr.bf16.mxu0 0
    %1271 = vmatpush1.bf16.msra.mxu0 0
    %1272 = vmatprep.subr.bf16.mxu0 0
    %1273 = vmatpush1.bf16.msra.mxu0 0
    %1274 = vmatprep.subr.bf16.mxu0 0
    %1275 = vmatpush1.bf16.msra.mxu0 0
    %1276 = vmatprep.subr.bf16.mxu0 0
    %1277 = vmatpush1.bf16.msra.mxu0 0
    %1278 = vmatprep.subr.bf16.mxu0 0
    %1279 = vmatpush1.bf16.msra.mxu0 0
    %1280 = vmatprep.subr.bf16.mxu0 0
    %1281 = vmatpush1.bf16.msra.mxu0 0
    %1282 = vmatprep.subr.bf16.mxu0 0
    %1283 = vmatpush1.bf16.msra.mxu0 0
    %1284 = vmatprep.mubr.bf16.mxu0 0
    %1285 = vmatmul.mubr.bf16.gmra.mrb[0].mxu0 %v848
    %v1286 = vpop.f32.mrb[0].mxu0
    %v1287 = vadd.f32 %v1203, %v1286
    %v1288 = vpop.f32.mrb[0].mxu0
    %v1289 = vpop.f32.mrb[0].mxu0
    %v1290 = vpop.f32.mrb[0].mxu0
    %1291 = vdwg.mxu0
    %v1292 = vmax.f32 %v1287, 0.0
    %v1293 = vpack.c.bf16 %v1292, %v1292
    %v1294 = vld [vmem:[#allocation10] sm:$0xf]
    %v1295 = vld [vmem:[#allocation10 + $0x4] sm:$0xf]
    %v1296 = vld [vmem:[#allocation10 + $0x8] sm:$0xf]
    %v1297 = vld [vmem:[#allocation10 + $0xc] sm:$0xf]
    %v1298 = vld [vmem:[#allocation10 + $0x10] sm:$0xf]
    %v1299 = vld [vmem:[#allocation10 + $0x14] sm:$0xf]
    %v1300 = vld [vmem:[#allocation10 + $0x18] sm:$0xf]
    %v1301 = vld [vmem:[#allocation10 + $0x1c] sm:$0xf]
    %v1302 = vld [vmem:[#allocation10 + $0x20] sm:$0xf]
    %v1303 = vld [vmem:[#allocation10 + $0x24] sm:$0xf]
    %v1304 = vld [vmem:[#allocation10 + $0x28] sm:$0xf]
    %v1305 = vld [vmem:[#allocation10 + $0x2c] sm:$0xf]
    %v1306 = vld [vmem:[#allocation10 + $0x30] sm:$0xf]
    %v1307 = vld [vmem:[#allocation10 + $0x34] sm:$0xf]
    %v1308 = vld [vmem:[#allocation10 + $0x38] sm:$0xf]
    %v1309 = vld [vmem:[#allocation10 + $0x3c] sm:$0xf]
    %v1310 = vld [vmem:[%s10] sm:$0x1]
    %v1327 = vunpack.c.l.b16 %v1294
    %v1328 = vunpack.c.l.b16 %v1295
    %v1329 = vunpack.c.l.b16 %v1296
    %v1330 = vunpack.c.l.b16 %v1297
    %v1331 = vunpack.c.l.b16 %v1298
    %v1332 = vunpack.c.l.b16 %v1299
    %v1333 = vunpack.c.l.b16 %v1300
    %v1334 = vunpack.c.l.b16 %v1301
    %v1335 = vunpack.c.l.b16 %v1302
    %v1336 = vunpack.c.l.b16 %v1303
    %v1337 = vunpack.c.l.b16 %v1304
    %v1338 = vunpack.c.l.b16 %v1305
    %v1339 = vunpack.c.l.b16 %v1306
    %v1340 = vunpack.c.l.b16 %v1307
    %v1341 = vunpack.c.l.b16 %v1308
    %v1342 = vunpack.c.l.b16 %v1309
    %v1343 = vpack.c.b16 %v1328, %v1327
    %v1344 = vpack.c.b16 %v1330, %v1329
    %v1345 = vpack.c.b16 %v1332, %v1331
    %v1346 = vpack.c.b16 %v1334, %v1333
    %v1347 = vpack.c.b16 %v1336, %v1335
    %v1348 = vpack.c.b16 %v1338, %v1337
    %v1349 = vpack.c.b16 %v1340, %v1339
    %v1350 = vpack.c.b16 %v1342, %v1341
    %1359 = vmatprep.subr.bf16.mxu0 0
    %1360 = vmatpush1.bf16.msra.mxu0 %v1343
    %1361 = vmatprep.subr.bf16.mxu0 0
    %1362 = vmatpush1.bf16.msra.mxu0 %v1344
    %1363 = vmatprep.subr.bf16.mxu0 0
    %1364 = vmatpush1.bf16.msra.mxu0 %v1345
    %1365 = vmatprep.subr.bf16.mxu0 0
    %1366 = vmatpush1.bf16.msra.mxu0 %v1346
    %1367 = vmatprep.subr.bf16.mxu0 0
    %1368 = vmatpush1.bf16.msra.mxu0 %v1347
    %1369 = vmatprep.subr.bf16.mxu0 0
    %1370 = vmatpush1.bf16.msra.mxu0 %v1348
    %1371 = vmatprep.subr.bf16.mxu0 0
    %1372 = vmatpush1.bf16.msra.mxu0 %v1349
    %1373 = vmatprep.subr.bf16.mxu0 0
    %1374 = vmatpush1.bf16.msra.mxu0 %v1350
    %1375 = vmatprep.subr.bf16.mxu0 0
    %1376 = vmatpush1.bf16.msra.mxu0 0
    %1377 = vmatprep.subr.bf16.mxu0 0
    %1378 = vmatpush1.bf16.msra.mxu0 0
    %1379 = vmatprep.subr.bf16.mxu0 0
    %1380 = vmatpush1.bf16.msra.mxu0 0
    %1381 = vmatprep.subr.bf16.mxu0 0
    %1382 = vmatpush1.bf16.msra.mxu0 0
    %1383 = vmatprep.subr.bf16.mxu0 0
    %1384 = vmatpush1.bf16.msra.mxu0 0
    %1385 = vmatprep.subr.bf16.mxu0 0
    %1386 = vmatpush1.bf16.msra.mxu0 0
    %1387 = vmatprep.subr.bf16.mxu0 0
    %1388 = vmatpush1.bf16.msra.mxu0 0
    %1389 = vmatprep.subr.bf16.mxu0 0
    %1390 = vmatpush1.bf16.msra.mxu0 0
    %1391 = vmatprep.mubr.bf16.mxu0 0
    %1392 = vmatmul.mubr.bf16.gmra.mrb[0].mxu0 %v1293
    %v1393 = vpop.f32.mrb[0].mxu0
    %v1394 = vadd.f32 %v1310, %v1393
    %v1395 = vpop.f32.mrb[0].mxu0
    %v1396 = vpop.f32.mrb[0].mxu0
    %v1397 = vpop.f32.mrb[0].mxu0
    %1398 = vdwg.mxu0
    %1399 = vst [vmem:[#allocation15] sm:$0x1] %v1394
    // Predicated region
    $region66: #{fused_forward.1} parent=1 // pred_check
      _
    $region67: #{fused_forward.1} parent=1 // pred_check_branch
      %1401 = sbr.rel (0) target = $region69
    $region68: #{fused_forward.1} parent=1 // pred_region
      %s1403 = ssub.s32 128, 128
      %1404 = vsyncadd [#allocation4], %s1403
      %s1406 = sshll.u32 [#allocation11], 4
      %s1407 = int_to_ptr.vmem [resolvable:$true] %s1406
      %1409 = dma.vmem_to_hbm [thread:$0]  %s1407, 128, %s11, [#allocation4]
    $region69: #{fused_forward.1} parent=1 // pred_fallthru
      _
    // Predicated region
    $region70: #{fused_forward.1} parent=1 // pred_check
      _
    $region71: #{fused_forward.1} parent=1 // pred_check_branch
      %1411 = sbr.rel (0) target = $region73
    $region72: #{fused_forward.1} parent=1 // pred_region
      %s1413 = ssub.s32 16, 16
      %1414 = vsyncadd [#allocation13], %s1413
      %s1416 = sshll.u32 [#allocation12], 4
      %s1417 = int_to_ptr.vmem [resolvable:$true] %s1416
      %1419 = dma.vmem_to_hbm [thread:$0]  %s1417, 16, %s12, [#allocation13]
    $region73: #{fused_forward.1} parent=1 // pred_fallthru
      _
    // Predicated region
    $region74: #{fused_forward.1} parent=1 // pred_check
      _
    $region75: #{fused_forward.1} parent=1 // pred_check_branch
      %1421 = sbr.rel (0) target = $region77
    $region76: #{fused_forward.1} parent=1 // pred_region
      %s1423 = ssub.s32 16, 16
      %1424 = vsyncadd [#allocation13], %s1423
      %s1426 = sshll.u32 [#allocation14], 4
      %s1427 = int_to_ptr.vmem [resolvable:$true] %s1426
      %1429 = dma.vmem_to_hbm [thread:$0]  %s1427, 16, %s13, [#allocation13]
    $region77: #{fused_forward.1} parent=1 // pred_fallthru
      _
    // Predicated region
    $region78: #{fused_forward.1} parent=1 // pred_check
      _
    $region79: #{fused_forward.1} parent=1 // pred_check_branch
      %1431 = sbr.rel (0) target = $region81
    $region80: #{fused_forward.1} parent=1 // pred_region
      %s1433 = ssub.s32 16, 16
      %1434 = vsyncadd [#allocation16], %s1433
      %s1436 = sshll.u32 [#allocation15], 4
      %s1437 = int_to_ptr.vmem [resolvable:$true] %s1436
      %1439 = dma.vmem_to_hbm [thread:$0]  %s1437, 16, %s14, [#allocation16]
    $region81: #{fused_forward.1} parent=1 // pred_fallthru
      _
    // Predicated region
    $region82: #{fused_forward.1} parent=1 // pred_check
      _
    $region83: #{fused_forward.1} parent=1 // pred_check_branch
      %1441 = sbr.rel (0) target = $region85
    $region84: #{fused_forward.1} parent=1 // pred_region
      %s1443 = ssub.s32 16, 16
      %1444 = vsyncadd [#allocation16], %s1443
      %s1446 = sshll.u32 [#allocation17], 4
      %s1447 = int_to_ptr.vmem [resolvable:$true] %s1446
      %1449 = dma.vmem_to_hbm [thread:$0]  %s1447, 16, %s15, [#allocation16]
    $region85: #{fused_forward.1} parent=1 // pred_fallthru
      _
    // Predicated region
    $region86: #{fused_forward.1} parent=1 // pred_check
      _
    $region87: #{fused_forward.1} parent=1 // pred_check_branch
      %1451 = sbr.rel (0) target = $region89
    $region88: #{fused_forward.1} parent=1 // pred_region
      %1452 = dma.done [#allocation4], 128
    $region89: #{fused_forward.1} parent=1 // pred_fallthru
      _
    // Predicated region
    $region90: #{fused_forward.1} parent=1 // pred_check
      _
    $region91: #{fused_forward.1} parent=1 // pred_check_branch
      %1454 = sbr.rel (0) target = $region93
    $region92: #{fused_forward.1} parent=1 // pred_region
      %1455 = dma.done [#allocation13], 16
    $region93: #{fused_forward.1} parent=1 // pred_fallthru
      _
    // Predicated region
    $region94: #{fused_forward.1} parent=1 // pred_check
      _
    $region95: #{fused_forward.1} parent=1 // pred_check_branch
      %1457 = sbr.rel (0) target = $region97
    $region96: #{fused_forward.1} parent=1 // pred_region
      %1458 = dma.done [#allocation13], 16
    $region97: #{fused_forward.1} parent=1 // pred_fallthru
      _
    // Predicated region
    $region98: #{fused_forward.1} parent=1 // pred_check
      _
    $region99: #{fused_forward.1} parent=1 // pred_check_branch
      %1460 = sbr.rel (0) target = $region101
    $region100: #{fused_forward.1} parent=1 // pred_region
      %1461 = dma.done [#allocation16], 16
    $region101: #{fused_forward.1} parent=1 // pred_fallthru
      _
    // Predicated region
    $region102: #{fused_forward.1} parent=1 // pred_check
      _
    $region103: #{fused_forward.1} parent=1 // pred_check_branch
      %1463 = sbr.rel (0) target = $region105
    $region104: #{fused_forward.1} parent=1 // pred_region
      %1464 = dma.done [#allocation16], 16
    $region105: #{fused_forward.1} parent=1 // pred_fallthru
      _
    %1465 = vsyncpa [#allocation3], 1
    %1466 = vsyncpa [#allocation6], 1
    %1467 = vsyncpa [#allocation9], 1
    %1468 = vsyncpa [#allocation4], 1
    %1469 = vsyncpa [#allocation13], 1
    %1470 = vsyncpa [#allocation16], 1

</llo_original>
